<compile_context>
chip_gen: v5e
topology: v5e:2x2
jax: 0.10.0
libtpu: 0.0.40
codegen_flags: <defaults>
</compile_context>

<pallas_src>
import functools

import jax
import jax.numpy as jnp
from jax.experimental import pallas as pl
from jax.experimental.pallas import tpu as pltpu


def _round_up(x: int, m: int) -> int:
    return ((x + m - 1) // m) * m


def _num_tensorcores_per_chip() -> int:
    """v7x has 2 TensorCores per chip; v5e/v6e have 1."""
    try:
        kind = jax.devices()[0].device_kind.lower()
    except Exception:  # defensive: unknown backend -> assume single core
        return 1
    return 2 if "v7" in kind else 1


def _mlp_kernel(num_linear, *refs):
    """Whole-MLP forward for one batch tile.

    refs = (x_ref, w0, b0, w1, b1, ..., w_{L-1}, b_{L-1}, out_ref)
    x is bf16; weights are bf16 and resident in VMEM across grid steps (constant
    index_map); biases are f32. Hidden layers use ReLU; the final layer goes
    through an exact sigmoid. Matmuls accumulate in f32 on the MXU.
    """
    x_ref = refs[0]
    out_ref = refs[-1]
    param_refs = refs[1:-1]

    h = x_ref[...]                                       # bf16 (bm, input_size)
    for layer in range(num_linear):
        w = param_refs[2 * layer][...]                   # bf16 (din, dout_pad)
        b = param_refs[2 * layer + 1][...]               # f32  (1, dout_pad)
        h = jnp.dot(h, w, preferred_element_type=jnp.float32) + b
        if layer < num_linear - 1:
            # ReLU in f32 (works on v5e's non-bf16 VPU too), back to bf16 for MXU.
            h = jnp.maximum(h, 0.0).astype(jnp.bfloat16)
    # Exact sigmoid: exp on EUP, exact divide (output tile is tiny).
    out_ref[...] = (1.0 / (1.0 + jnp.exp(-h))).astype(out_ref.dtype)


def prepare_params(params, input_size):
    """One-time parameter prep (hoisted out of the forward path).

    Pads output feature dims to multiples of 128 (lane-dense) and casts weights
    to bf16; biases stay f32. Layer-0 K (== input_size) is left unpadded since
    the activation block's last dim equals the full array extent.
    Zero padding is numerically inert: padded hidden columns stay exactly 0
    through ReLU, and padded output columns are sliced off in the wrapper.
    """
    flat = []
    dims = []
    prev = input_size
    for w, b in params:
        din, dout = w.shape
        assert din == prev or _round_up(din, 128) == prev
        dout_pad = _round_up(dout, 128)
        w_p = jnp.zeros((prev, dout_pad), jnp.bfloat16)
        w_p = w_p.at[:din, :dout].set(w.astype(jnp.bfloat16))
        b_p = jnp.zeros((1, dout_pad), jnp.float32)
        b_p = b_p.at[:, :dout].set(b.reshape(1, -1).astype(jnp.float32))
        flat += [w_p, b_p]
        dims.append((prev, dout_pad))
        prev = dout_pad
    return tuple(flat), tuple(dims)


@functools.partial(jax.jit, static_argnames=("dims", "output_size", "num_tc"))
def nnmodel_forward(u, flat_params, *, dims, output_size, num_tc=1):
    """u: (B, input_size) float. flat_params/dims come from prepare_params()."""
    num_linear = len(dims)
    batch, input_size = u.shape
    out_pad = dims[-1][1]

    # ---- batch tiling.
    # v5e/v6e (1 TC): one fat tile avoids per-grid-step overhead (~0.35 us/step).
    # v7x (2 TCs): keep >=2 balanced tiles so ("parallel",) uses both cores.
    n_tiles = num_tc if (num_tc >= 2 and batch >= 2 * 128) else 1
    bm = _round_up(-(-batch // n_tiles), 16)      # bf16 sublane packing: mult of 16
    bm = min(bm, 2048)                            # bound double-buffered act slabs
    batch_p = _round_up(batch, bm)
    grid = (batch_p // bm,)

    # ---- activations: single bf16 cast; pad batch only when actually needed.
    u_bf = u.astype(jnp.bfloat16)
    if batch_p != batch:
        u_bf = jnp.pad(u_bf, ((0, batch_p - batch), (0, 0)))

    # Activations tiled over batch (last dim == full extent, so K is unpadded).
    # Parameters use constant index_maps -> same block stays resident in VMEM.
    in_specs = [pl.BlockSpec((bm, input_size), lambda i: (i, 0))]
    for din, dout_pad in dims:
        in_specs.append(pl.BlockSpec((din, dout_pad), lambda i: (0, 0)))
        in_specs.append(pl.BlockSpec((1, dout_pad), lambda i: (0, 0)))
    out_spec = pl.BlockSpec((bm, out_pad), lambda i: (i, 0))

    # ---- VMEM budget (v7x: 64 MiB physical / 32 MiB default scoped).
    # Resident params (x2 in case Mosaic double-buffers the constant-index
    # blocks) + double-buffered activation in/out slabs, with 4x headroom.
    # TODO(synk): if h_size/h_layers scale up, mark the weight specs
    # pipeline_mode=pl.Buffered(1) and/or add a layer/K grid axis instead of
    # holding all parameters resident.
    param_bytes = 2 * sum(2 * di * do + 4 * do for di, do in dims)
    act_bytes = 2 * bm * (input_size * 2 + out_pad * 4)
    vmem_limit = min(max(4 * (param_bytes + act_bytes), 16 << 20), 32 << 20)

    flops = 2 * batch_p * sum(di * do for di, do in dims)
    bytes_accessed = (batch_p * input_size * 2                       # bf16 acts in
                      + sum(2 * di * do + 4 * do for di, do in dims)  # params
                      + batch_p * out_pad * 4)                        # f32 out
    cost = pl.CostEstimate(flops=flops,
                           transcendentals=batch_p * out_pad,
                           bytes_accessed=bytes_accessed)

    out_padded = pl.pallas_call(
        functools.partial(_mlp_kernel, num_linear),
        out_shape=jax.ShapeDtypeStruct((batch_p, out_pad), jnp.float32),
        grid=grid,
        in_specs=in_specs,
        out_specs=out_spec,
        compiler_params=pltpu.CompilerParams(
            dimension_semantics=("parallel",),   # v7x: shard batch tiles over 2 TCs
            vmem_limit_bytes=vmem_limit),
        cost_estimate=cost,
    )(u_bf, *flat_params)

    return out_padded[:batch, :output_size]


def init_params(key, input_size, output_size, h_size, h_layers):
    """Deterministic init matching the PyTorch module's __init__:
    xavier_normal_(weight, gain=calculate_gain('relu')=sqrt(2)); bias keeps
    PyTorch's default Linear init U(-1/sqrt(fan_in), 1/sqrt(fan_in))."""
    dims = [input_size] + [h_size] * h_layers + [output_size]
    params = []
    gain = jnp.sqrt(2.0)  # calculate_gain('relu')
    for i in range(len(dims) - 1):
        fan_in, fan_out = dims[i], dims[i + 1]
        key, kw, kb = jax.random.split(key, 3)
        std = gain * jnp.sqrt(2.0 / (fan_in + fan_out))
        w = std * jax.random.normal(kw, (fan_in, fan_out), dtype=jnp.float32)
        bound = 1.0 / jnp.sqrt(fan_in)
        b = jax.random.uniform(kb, (fan_out,), minval=-bound, maxval=bound,
                               dtype=jnp.float32)
        params.append((w, b))
    return params


def reference_forward(u, params):
    """Pure-JAX reference mirroring the kernel's numerics
    (bf16 matmul operands, f32 accumulation, f32 biases, exact sigmoid)."""
    h = u.astype(jnp.bfloat16)
    n = len(params)
    for i, (w, b) in enumerate(params):
        h = jnp.dot(h, w.astype(jnp.bfloat16), preferred_element_type=jnp.float32)
        h = h + b.astype(jnp.float32)
        if i < n - 1:
            h = jnp.maximum(h, 0.0).astype(jnp.bfloat16)
    return jax.nn.sigmoid(h)


if __name__ == "__main__":
    # Small MLP on flat feature vectors; batch=512 exercises the batch grid
    # (1 tile on v5e/v6e, 2 balanced tiles on v7x).
    batch = 512
    input_size = 32
    output_size = 16
    h_size = 64
    h_layers = 2  # -> 3 Linear layers total

    key = jax.random.PRNGKey(0)
    key, ku = jax.random.split(key)
    u = jax.random.normal(ku, (batch, input_size), dtype=jnp.float32)
    params = init_params(key, input_size, output_size, h_size, h_layers)

    # One-time parameter prep, hoisted out of the forward path.
    flat_params, dims = prepare_params(params, input_size)
    num_tc = _num_tensorcores_per_chip()

    out = jax.block_until_ready(
        nnmodel_forward(u, flat_params, dims=dims, output_size=output_size,
                        num_tc=num_tc))
    ref = reference_forward(u, params)

    assert out.shape == (batch, output_size)
    # Sigmoid is exact now; tolerance covers bf16 matmul operand rounding only.
    assert jnp.allclose(out, ref, atol=5e-3, rtol=0), "mismatch vs JAX reference"

    print("KERNEL_OK")
</pallas_src>

<mosaic_0001>
module attributes {stable_mosaic.version = 11 : i64} {
  func.func @_mlp_kernel(%arg0: i32, %arg1: memref<512x32xbf16, #tpu.memory_space<vmem>>, %arg2: memref<32x128xbf16, #tpu.memory_space<vmem>>, %arg3: memref<1x128xf32, #tpu.memory_space<vmem>>, %arg4: memref<128x128xbf16, #tpu.memory_space<vmem>>, %arg5: memref<1x128xf32, #tpu.memory_space<vmem>>, %arg6: memref<128x128xbf16, #tpu.memory_space<vmem>>, %arg7: memref<1x128xf32, #tpu.memory_space<vmem>>, %arg8: memref<512x128xf32, #tpu.memory_space<vmem>>) attributes {dimension_semantics = [#tpu.dimension_semantics<parallel>], iteration_bounds = array<i64: 1>, scalar_prefetch = 0 : i64, scratch_operands = 0 : i64, tpu.core_type = #tpu.core_type<tc>, window_params = [{transform_indices = @transform_0, window_bounds = array<i64: 512, 32>}, {pipeline_mode = #tpu.pipeline_mode<synchronous>, transform_indices = @transform_1, window_bounds = array<i64: 32, 128>}, {pipeline_mode = #tpu.pipeline_mode<synchronous>, transform_indices = @transform_2, window_bounds = array<i64: 1, 128>}, {pipeline_mode = #tpu.pipeline_mode<synchronous>, transform_indices = @transform_3, window_bounds = array<i64: 128, 128>}, {pipeline_mode = #tpu.pipeline_mode<synchronous>, transform_indices = @transform_4, window_bounds = array<i64: 1, 128>}, {pipeline_mode = #tpu.pipeline_mode<synchronous>, transform_indices = @transform_5, window_bounds = array<i64: 128, 128>}, {pipeline_mode = #tpu.pipeline_mode<synchronous>, transform_indices = @transform_6, window_bounds = array<i64: 1, 128>}, {transform_indices = @transform_7, window_bounds = array<i64: 512, 128>}]} {
    %c0 = arith.constant 0 : index
    %c0_0 = arith.constant 0 : index
    %0 = vector.load %arg1[%c0, %c0_0] : memref<512x32xbf16, #tpu.memory_space<vmem>>, vector<512x32xbf16>
    %c0_1 = arith.constant 0 : index
    %c0_2 = arith.constant 0 : index
    %1 = vector.load %arg2[%c0_1, %c0_2] : memref<32x128xbf16, #tpu.memory_space<vmem>>, vector<32x128xbf16>
    %c0_3 = arith.constant 0 : index
    %c0_4 = arith.constant 0 : index
    %2 = vector.load %arg3[%c0_3, %c0_4] : memref<1x128xf32, #tpu.memory_space<vmem>>, vector<1x128xf32>
    %cst = arith.constant dense<0.000000e+00> : vector<512x128xf32>
    %3 = tpu.matmul %0, %1, %cst {dimension_numbers = #tpu.dot_dimension_numbers<[1], [0], [0], [1], [0, 0, 1, 1], [], []>} : vector<512x32xbf16>, vector<32x128xbf16>, vector<512x128xf32> -> vector<512x128xf32>
    %4 = vector.broadcast %2 : vector<1x128xf32> to vector<512x128xf32>
    %5 = arith.addf %3, %4 : vector<512x128xf32>
    %cst_5 = arith.constant 0.000000e+00 : f32
    %6 = vector.broadcast %cst_5 : f32 to vector<512x128xf32>
    %7 = arith.maximumf %5, %6 : vector<512x128xf32>
    %8 = arith.truncf %7 : vector<512x128xf32> to vector<512x128xbf16>
    %c0_6 = arith.constant 0 : index
    %c0_7 = arith.constant 0 : index
    %9 = vector.load %arg4[%c0_6, %c0_7] : memref<128x128xbf16, #tpu.memory_space<vmem>>, vector<128x128xbf16>
    %c0_8 = arith.constant 0 : index
    %c0_9 = arith.constant 0 : index
    %10 = vector.load %arg5[%c0_8, %c0_9] : memref<1x128xf32, #tpu.memory_space<vmem>>, vector<1x128xf32>
    %cst_10 = arith.constant dense<0.000000e+00> : vector<512x128xf32>
    %11 = tpu.matmul %8, %9, %cst_10 {dimension_numbers = #tpu.dot_dimension_numbers<[1], [0], [0], [1], [0, 0, 1, 1], [], []>} : vector<512x128xbf16>, vector<128x128xbf16>, vector<512x128xf32> -> vector<512x128xf32>
    %12 = vector.broadcast %10 : vector<1x128xf32> to vector<512x128xf32>
    %13 = arith.addf %11, %12 : vector<512x128xf32>
    %cst_11 = arith.constant 0.000000e+00 : f32
    %14 = vector.broadcast %cst_11 : f32 to vector<512x128xf32>
    %15 = arith.maximumf %13, %14 : vector<512x128xf32>
    %16 = arith.truncf %15 : vector<512x128xf32> to vector<512x128xbf16>
    %c0_12 = arith.constant 0 : index
    %c0_13 = arith.constant 0 : index
    %17 = vector.load %arg6[%c0_12, %c0_13] : memref<128x128xbf16, #tpu.memory_space<vmem>>, vector<128x128xbf16>
    %c0_14 = arith.constant 0 : index
    %c0_15 = arith.constant 0 : index
    %18 = vector.load %arg7[%c0_14, %c0_15] : memref<1x128xf32, #tpu.memory_space<vmem>>, vector<1x128xf32>
    %cst_16 = arith.constant dense<0.000000e+00> : vector<512x128xf32>
    %19 = tpu.matmul %16, %17, %cst_16 {dimension_numbers = #tpu.dot_dimension_numbers<[1], [0], [0], [1], [0, 0, 1, 1], [], []>} : vector<512x128xbf16>, vector<128x128xbf16>, vector<512x128xf32> -> vector<512x128xf32>
    %20 = vector.broadcast %18 : vector<1x128xf32> to vector<512x128xf32>
    %21 = arith.addf %19, %20 : vector<512x128xf32>
    %cst_17 = arith.constant 0.000000e+00 : f32
    %22 = vector.broadcast %cst_17 : f32 to vector<512x128xf32>
    %23 = arith.subf %22, %21 : vector<512x128xf32>
    %24 = math.exp %23 : vector<512x128xf32>
    %cst_18 = arith.constant 1.000000e+00 : f32
    %25 = vector.broadcast %cst_18 : f32 to vector<512x128xf32>
    %26 = arith.addf %25, %24 : vector<512x128xf32>
    %cst_19 = arith.constant 1.000000e+00 : f32
    %27 = vector.broadcast %cst_19 : f32 to vector<512x128xf32>
    %28 = arith.divf %27, %26 : vector<512x128xf32>
    %c0_20 = arith.constant 0 : index
    %c0_21 = arith.constant 0 : index
    %29 = vector.load %arg8[%c0_20, %c0_21] : memref<512x128xf32, #tpu.memory_space<vmem>>, vector<512x128xf32>
    tpu.vector_store %arg8[%c0_20, %c0_21], %28 {strides = array<i32>} : memref<512x128xf32, #tpu.memory_space<vmem>>, vector<512x128xf32>,
    return
  }
  func.func @transform_0(%arg0: i32) -> (i32, i32) {
    %c0_i32 = arith.constant 0 : i32
    %c0_i32_0 = arith.constant 0 : i32
    return %arg0, %c0_i32 : i32, i32
  }
  func.func @transform_1(%arg0: i32) -> (i32, i32) {
    %c0_i32 = arith.constant 0 : i32
    %c0_i32_0 = arith.constant 0 : i32
    %c0_i32_1 = arith.constant 0 : i32
    return %c0_i32, %c0_i32_0 : i32, i32
  }
  func.func @transform_2(%arg0: i32) -> (i32, i32) {
    %c0_i32 = arith.constant 0 : i32
    %c0_i32_0 = arith.constant 0 : i32
    %c0_i32_1 = arith.constant 0 : i32
    return %c0_i32, %c0_i32_0 : i32, i32
  }
  func.func @transform_3(%arg0: i32) -> (i32, i32) {
    %c0_i32 = arith.constant 0 : i32
    %c0_i32_0 = arith.constant 0 : i32
    %c0_i32_1 = arith.constant 0 : i32
    return %c0_i32, %c0_i32_0 : i32, i32
  }
  func.func @transform_4(%arg0: i32) -> (i32, i32) {
    %c0_i32 = arith.constant 0 : i32
    %c0_i32_0 = arith.constant 0 : i32
    %c0_i32_1 = arith.constant 0 : i32
    return %c0_i32, %c0_i32_0 : i32, i32
  }
  func.func @transform_5(%arg0: i32) -> (i32, i32) {
    %c0_i32 = arith.constant 0 : i32
    %c0_i32_0 = arith.constant 0 : i32
    %c0_i32_1 = arith.constant 0 : i32
    return %c0_i32, %c0_i32_0 : i32, i32
  }
  func.func @transform_6(%arg0: i32) -> (i32, i32) {
    %c0_i32 = arith.constant 0 : i32
    %c0_i32_0 = arith.constant 0 : i32
    %c0_i32_1 = arith.constant 0 : i32
    return %c0_i32, %c0_i32_0 : i32, i32
  }
  func.func @transform_7(%arg0: i32) -> (i32, i32) {
    %c0_i32 = arith.constant 0 : i32
    %c0_i32_0 = arith.constant 0 : i32
    return %arg0, %c0_i32 : i32, i32
  }
}

</mosaic_0001>

<llo_original>
// kernel: nnmodel_forward.1
$region0: #{nnmodel_forward.1}
  #allocation0 [shape = 'u32[]', space=smem, size = 0x4, offset = 0x4, fixed_abs, tag = 'smem constant byte address 0x4 - core index']
  #allocation1 [shape = 'u32[72,128]{1,0:T(1,128)}', space=vmem, size = 0x9000, scoped, tag = 'internal scratch']
  %s0 = inlined_call_operand.vmem [shape: bf16[512,32], index: 0, kind: input, shape index: {}]
  %s1 = inlined_call_operand.vmem [shape: bf16[32,128], index: 1, kind: input, shape index: {}]
  %s2 = inlined_call_operand.vmem [shape: f32[1,128], index: 2, kind: input, shape index: {}]
  %s3 = inlined_call_operand.vmem [shape: bf16[128,128], index: 3, kind: input, shape index: {}]
  %s4 = inlined_call_operand.vmem [shape: f32[1,128], index: 4, kind: input, shape index: {}]
  %s5 = inlined_call_operand.vmem [shape: bf16[128,128], index: 5, kind: input, shape index: {}]
  %s6 = inlined_call_operand.vmem [shape: f32[1,128], index: 6, kind: input, shape index: {}]
  %s7 = inlined_call_operand.vmem [shape: f32[512,128], index: 7, kind: output, shape index: {}]
  %s8 = sld [smem:[#allocation0]]
  $region38: #{nnmodel_forward.1} parent=0
    _
  %s10 = ssub.s32 1, %s8
  %s11 = scalar_select 0, %s10, %s8
  // Predicated region
  $region2: #{nnmodel_forward.1} parent=0 // pred_check
    _
  $region3: #{nnmodel_forward.1} parent=0 // pred_check_branch
    %13 = sbr.rel (0) target = $region5
  $region4: #{nnmodel_forward.1} parent=0 // pred_region
    _
  $region5: #{nnmodel_forward.1} parent=0 // pred_fallthru
    _
  // Predicated region
  $region6: #{nnmodel_forward.1} parent=0 // pred_check
    _
  $region7: #{nnmodel_forward.1} parent=0 // pred_check_branch
    %15 = sbr.rel (0) target = $region9
  $region8: #{nnmodel_forward.1} parent=0 // pred_region
    _
  $region9: #{nnmodel_forward.1} parent=0 // pred_fallthru
    _
  // Predicated region
  $region10: #{nnmodel_forward.1} parent=0 // pred_check
    _
  $region11: #{nnmodel_forward.1} parent=0 // pred_check_branch
    %17 = sbr.rel (0) target = $region13
  $region12: #{nnmodel_forward.1} parent=0 // pred_region
    _
  $region13: #{nnmodel_forward.1} parent=0 // pred_fallthru
    _
  // Predicated region
  $region14: #{nnmodel_forward.1} parent=0 // pred_check
    _
  $region15: #{nnmodel_forward.1} parent=0 // pred_check_branch
    %19 = sbr.rel (0) target = $region17
  $region16: #{nnmodel_forward.1} parent=0 // pred_region
    _
  $region17: #{nnmodel_forward.1} parent=0 // pred_fallthru
    _
  // Predicated region
  $region18: #{nnmodel_forward.1} parent=0 // pred_check
    _
  $region19: #{nnmodel_forward.1} parent=0 // pred_check_branch
    %21 = sbr.rel (0) target = $region21
  $region20: #{nnmodel_forward.1} parent=0 // pred_region
    _
  $region21: #{nnmodel_forward.1} parent=0 // pred_fallthru
    _
  // Predicated region
  $region22: #{nnmodel_forward.1} parent=0 // pred_check
    _
  $region23: #{nnmodel_forward.1} parent=0 // pred_check_branch
    %23 = sbr.rel (0) target = $region25
  $region24: #{nnmodel_forward.1} parent=0 // pred_region
    _
  $region25: #{nnmodel_forward.1} parent=0 // pred_fallthru
    _
  // Predicated region
  $region26: #{nnmodel_forward.1} parent=0 // pred_check
    _
  $region27: #{nnmodel_forward.1} parent=0 // pred_check_branch
    %25 = sbr.rel (0) target = $region29
  $region28: #{nnmodel_forward.1} parent=0 // pred_region
    _
  $region29: #{nnmodel_forward.1} parent=0 // pred_fallthru
    _
  %v27 = vld [vmem:[%s0] sm:$0xf]
  %v28 = vld [vmem:[%s0 + $0x4] sm:$0xf]
  %v29 = vld [vmem:[%s0 + $0x8] sm:$0xf]
  %v30 = vld [vmem:[%s0 + $0xc] sm:$0xf]
  %v31 = vld [vmem:[%s0 + $0x10] sm:$0xf]
  %v32 = vld [vmem:[%s0 + $0x14] sm:$0xf]
  %v33 = vld [vmem:[%s0 + $0x18] sm:$0xf]
  %v34 = vld [vmem:[%s0 + $0x1c] sm:$0xf]
  %v35 = vld [vmem:[%s0 + $0x20] sm:$0xf]
  %v36 = vld [vmem:[%s0 + $0x24] sm:$0xf]
  %v37 = vld [vmem:[%s0 + $0x28] sm:$0xf]
  %v38 = vld [vmem:[%s0 + $0x2c] sm:$0xf]
  %v39 = vld [vmem:[%s0 + $0x30] sm:$0xf]
  %v40 = vld [vmem:[%s0 + $0x34] sm:$0xf]
  %v41 = vld [vmem:[%s0 + $0x38] sm:$0xf]
  %v42 = vld [vmem:[%s0 + $0x3c] sm:$0xf]
  %v43 = vld [vmem:[%s0 + $0x40] sm:$0xf]
  %v44 = vld [vmem:[%s0 + $0x44] sm:$0xf]
  %v45 = vld [vmem:[%s0 + $0x48] sm:$0xf]
  %v46 = vld [vmem:[%s0 + $0x4c] sm:$0xf]
  %v47 = vld [vmem:[%s0 + $0x50] sm:$0xf]
  %v48 = vld [vmem:[%s0 + $0x54] sm:$0xf]
  %v49 = vld [vmem:[%s0 + $0x58] sm:$0xf]
  %v50 = vld [vmem:[%s0 + $0x5c] sm:$0xf]
  %v51 = vld [vmem:[%s0 + $0x60] sm:$0xf]
  %v52 = vld [vmem:[%s0 + $0x64] sm:$0xf]
  %v53 = vld [vmem:[%s0 + $0x68] sm:$0xf]
  %v54 = vld [vmem:[%s0 + $0x6c] sm:$0xf]
  %v55 = vld [vmem:[%s0 + $0x70] sm:$0xf]
  %v56 = vld [vmem:[%s0 + $0x74] sm:$0xf]
  %v57 = vld [vmem:[%s0 + $0x78] sm:$0xf]
  %v58 = vld [vmem:[%s0 + $0x7c] sm:$0xf]
  %v59 = vld [vmem:[%s0 + $0x80] sm:$0xf]
  %v60 = vld [vmem:[%s0 + $0x84] sm:$0xf]
  %v61 = vld [vmem:[%s0 + $0x88] sm:$0xf]
  %v62 = vld [vmem:[%s0 + $0x8c] sm:$0xf]
  %v63 = vld [vmem:[%s0 + $0x90] sm:$0xf]
  %v64 = vld [vmem:[%s0 + $0x94] sm:$0xf]
  %v65 = vld [vmem:[%s0 + $0x98] sm:$0xf]
  %v66 = vld [vmem:[%s0 + $0x9c] sm:$0xf]
  %v67 = vld [vmem:[%s0 + $0xa0] sm:$0xf]
  %v68 = vld [vmem:[%s0 + $0xa4] sm:$0xf]
  %v69 = vld [vmem:[%s0 + $0xa8] sm:$0xf]
  %v70 = vld [vmem:[%s0 + $0xac] sm:$0xf]
  %v71 = vld [vmem:[%s0 + $0xb0] sm:$0xf]
  %v72 = vld [vmem:[%s0 + $0xb4] sm:$0xf]
  %v73 = vld [vmem:[%s0 + $0xb8] sm:$0xf]
  %v74 = vld [vmem:[%s0 + $0xbc] sm:$0xf]
  %v75 = vld [vmem:[%s0 + $0xc0] sm:$0xf]
  %v76 = vld [vmem:[%s0 + $0xc4] sm:$0xf]
  %v77 = vld [vmem:[%s0 + $0xc8] sm:$0xf]
  %v78 = vld [vmem:[%s0 + $0xcc] sm:$0xf]
  %v79 = vld [vmem:[%s0 + $0xd0] sm:$0xf]
  %v80 = vld [vmem:[%s0 + $0xd4] sm:$0xf]
  %v81 = vld [vmem:[%s0 + $0xd8] sm:$0xf]
  %v82 = vld [vmem:[%s0 + $0xdc] sm:$0xf]
  %v83 = vld [vmem:[%s0 + $0xe0] sm:$0xf]
  %v84 = vld [vmem:[%s0 + $0xe4] sm:$0xf]
  %v85 = vld [vmem:[%s0 + $0xe8] sm:$0xf]
  %v86 = vld [vmem:[%s0 + $0xec] sm:$0xf]
  %v87 = vld [vmem:[%s0 + $0xf0] sm:$0xf]
  %v88 = vld [vmem:[%s0 + $0xf4] sm:$0xf]
  %v89 = vld [vmem:[%s0 + $0xf8] sm:$0xf]
  %v90 = vld [vmem:[%s0 + $0xfc] sm:$0xf]
  %v91 = vld [vmem:[%s1] sm:$0xf]
  %v92 = vld [vmem:[%s1 + $0x4] sm:$0xf]
  %v93 = vld [vmem:[%s1 + $0x8] sm:$0xf]
  %v94 = vld [vmem:[%s1 + $0xc] sm:$0xf]
  %v95 = vld [vmem:[%s2] sm:$0x1]
  %v97 = vperm.slane %v95, 0
  %v163 = vunpack.c.l.b16 %v27
  %v164 = vunpack.c.l.b16 %v28
  %v165 = vunpack.c.l.b16 %v29
  %v166 = vunpack.c.l.b16 %v30
  %v167 = vunpack.c.l.b16 %v31
  %v168 = vunpack.c.l.b16 %v32
  %v169 = vunpack.c.l.b16 %v33
  %v170 = vunpack.c.l.b16 %v34
  %v171 = vunpack.c.l.b16 %v35
  %v172 = vunpack.c.l.b16 %v36
  %v173 = vunpack.c.l.b16 %v37
  %v174 = vunpack.c.l.b16 %v38
  %v175 = vunpack.c.l.b16 %v39
  %v176 = vunpack.c.l.b16 %v40
  %v177 = vunpack.c.l.b16 %v41
  %v178 = vunpack.c.l.b16 %v42
  %v179 = vunpack.c.l.b16 %v43
  %v180 = vunpack.c.l.b16 %v44
  %v181 = vunpack.c.l.b16 %v45
  %v182 = vunpack.c.l.b16 %v46
  %v183 = vunpack.c.l.b16 %v47
  %v184 = vunpack.c.l.b16 %v48
  %v185 = vunpack.c.l.b16 %v49
  %v186 = vunpack.c.l.b16 %v50
  %v187 = vunpack.c.l.b16 %v51
  %v188 = vunpack.c.l.b16 %v52
  %v189 = vunpack.c.l.b16 %v53
  %v190 = vunpack.c.l.b16 %v54
  %v191 = vunpack.c.l.b16 %v55
  %v192 = vunpack.c.l.b16 %v56
  %v193 = vunpack.c.l.b16 %v57
  %v194 = vunpack.c.l.b16 %v58
  %v195 = vunpack.c.l.b16 %v59
  %v196 = vunpack.c.l.b16 %v60
  %v197 = vunpack.c.l.b16 %v61
  %v198 = vunpack.c.l.b16 %v62
  %v199 = vunpack.c.l.b16 %v63
  %v200 = vunpack.c.l.b16 %v64
  %v201 = vunpack.c.l.b16 %v65
  %v202 = vunpack.c.l.b16 %v66
  %v203 = vunpack.c.l.b16 %v67
  %v204 = vunpack.c.l.b16 %v68
  %v205 = vunpack.c.l.b16 %v69
  %v206 = vunpack.c.l.b16 %v70
  %v207 = vunpack.c.l.b16 %v71
  %v208 = vunpack.c.l.b16 %v72
  %v209 = vunpack.c.l.b16 %v73
  %v210 = vunpack.c.l.b16 %v74
  %v211 = vunpack.c.l.b16 %v75
  %v212 = vunpack.c.l.b16 %v76
  %v213 = vunpack.c.l.b16 %v77
  %v214 = vunpack.c.l.b16 %v78
  %v215 = vunpack.c.l.b16 %v79
  %v216 = vunpack.c.l.b16 %v80
  %v217 = vunpack.c.l.b16 %v81
  %v218 = vunpack.c.l.b16 %v82
  %v219 = vunpack.c.l.b16 %v83
  %v220 = vunpack.c.l.b16 %v84
  %v221 = vunpack.c.l.b16 %v85
  %v222 = vunpack.c.l.b16 %v86
  %v223 = vunpack.c.l.b16 %v87
  %v224 = vunpack.c.l.b16 %v88
  %v225 = vunpack.c.l.b16 %v89
  %v226 = vunpack.c.l.b16 %v90
  %v227 = vpack.c.b16 %v164, %v163
  %v228 = vpack.c.b16 %v166, %v165
  %v229 = vpack.c.b16 %v168, %v167
  %v230 = vpack.c.b16 %v170, %v169
  %v231 = vpack.c.b16 %v172, %v171
  %v232 = vpack.c.b16 %v174, %v173
  %v233 = vpack.c.b16 %v176, %v175
  %v234 = vpack.c.b16 %v178, %v177
  %v235 = vpack.c.b16 %v180, %v179
  %v236 = vpack.c.b16 %v182, %v181
  %v237 = vpack.c.b16 %v184, %v183
  %v238 = vpack.c.b16 %v186, %v185
  %v239 = vpack.c.b16 %v188, %v187
  %v240 = vpack.c.b16 %v190, %v189
  %v241 = vpack.c.b16 %v192, %v191
  %v242 = vpack.c.b16 %v194, %v193
  %v243 = vpack.c.b16 %v196, %v195
  %v244 = vpack.c.b16 %v198, %v197
  %v245 = vpack.c.b16 %v200, %v199
  %v246 = vpack.c.b16 %v202, %v201
  %v247 = vpack.c.b16 %v204, %v203
  %v248 = vpack.c.b16 %v206, %v205
  %v249 = vpack.c.b16 %v208, %v207
  %v250 = vpack.c.b16 %v210, %v209
  %v251 = vpack.c.b16 %v212, %v211
  %v252 = vpack.c.b16 %v214, %v213
  %v253 = vpack.c.b16 %v216, %v215
  %v254 = vpack.c.b16 %v218, %v217
  %v255 = vpack.c.b16 %v220, %v219
  %v256 = vpack.c.b16 %v222, %v221
  %v257 = vpack.c.b16 %v224, %v223
  %v258 = vpack.c.b16 %v226, %v225
  %v263 = vunpack.c.l.b16 %v91
  %v264 = vunpack.c.l.b16 %v92
  %v265 = vunpack.c.l.b16 %v93
  %v266 = vunpack.c.l.b16 %v94
  %v267 = vpack.c.b16 %v264, %v263
  %v268 = vpack.c.b16 %v266, %v265
  %vm271 = vcmask 261120
  %v273 = vsel %vm271, %v227, 0
  %v276 = vsel %vm271, %v228, 0
  %v279 = vsel %vm271, %v229, 0
  %v282 = vsel %vm271, %v230, 0
  %v285 = vsel %vm271, %v231, 0
  %v288 = vsel %vm271, %v232, 0
  %v291 = vsel %vm271, %v233, 0
  %v294 = vsel %vm271, %v234, 0
  %v297 = vsel %vm271, %v235, 0
  %v300 = vsel %vm271, %v236, 0
  %v303 = vsel %vm271, %v237, 0
  %v306 = vsel %vm271, %v238, 0
  %v309 = vsel %vm271, %v239, 0
  %v312 = vsel %vm271, %v240, 0
  %v315 = vsel %vm271, %v241, 0
  %v318 = vsel %vm271, %v242, 0
  %v321 = vsel %vm271, %v243, 0
  %v324 = vsel %vm271, %v244, 0
  %v327 = vsel %vm271, %v245, 0
  %v330 = vsel %vm271, %v246, 0
  %v333 = vsel %vm271, %v247, 0
  %v336 = vsel %vm271, %v248, 0
  %v339 = vsel %vm271, %v249, 0
  %v342 = vsel %vm271, %v250, 0
  %v345 = vsel %vm271, %v251, 0
  %v348 = vsel %vm271, %v252, 0
  %v351 = vsel %vm271, %v253, 0
  %v354 = vsel %vm271, %v254, 0
  %v357 = vsel %vm271, %v255, 0
  %v360 = vsel %vm271, %v256, 0
  %v363 = vsel %vm271, %v257, 0
  %v366 = vsel %vm271, %v258, 0
  %368 = vmatpush.bf16.msra.mxu0 0
  %369 = vmatpush.bf16.msra.mxu0 0
  %370 = vmatpush.bf16.msra.mxu0 0
  %371 = vmatpush.bf16.msra.mxu0 0
  %372 = vmatpush.bf16.msra.mxu0 0
  %373 = vmatpush.bf16.msra.mxu0 0
  %374 = vmatpush.bf16.msra.mxu0 %v268
  %375 = vmatpush.bf16.msra.mxu0 %v267
  %376 = vmatmul.bf16.gmra.mxu0 %v273
  %v377 = vpop.f32.mrf.mxu0
  %v378 = vadd.f32 %v97, %v377
  %v379 = vpop.f32.mrf.mxu0
  %v380 = vadd.f32 %v97, %v379
  %381 = vmatmul.bf16.gmra.mxu0 %v276
  %v382 = vpop.f32.mrf.mxu0
  %v383 = vadd.f32 %v97, %v382
  %v384 = vpop.f32.mrf.mxu0
  %v385 = vadd.f32 %v97, %v384
  %386 = vmatmul.bf16.gmra.mxu0 %v279
  %v387 = vpop.f32.mrf.mxu0
  %v388 = vadd.f32 %v97, %v387
  %v389 = vpop.f32.mrf.mxu0
  %v390 = vadd.f32 %v97, %v389
  %391 = vmatmul.bf16.gmra.mxu0 %v282
  %v392 = vpop.f32.mrf.mxu0
  %v393 = vadd.f32 %v97, %v392
  %v394 = vpop.f32.mrf.mxu0
  %v395 = vadd.f32 %v97, %v394
  %396 = vmatmul.bf16.gmra.mxu0 %v285
  %v397 = vpop.f32.mrf.mxu0
  %v398 = vadd.f32 %v97, %v397
  %v399 = vpop.f32.mrf.mxu0
  %v400 = vadd.f32 %v97, %v399
  %401 = vmatmul.bf16.gmra.mxu0 %v288
  %v402 = vpop.f32.mrf.mxu0
  %v403 = vadd.f32 %v97, %v402
  %v404 = vpop.f32.mrf.mxu0
  %v405 = vadd.f32 %v97, %v404
  %406 = vmatmul.bf16.gmra.mxu0 %v291
  %v407 = vpop.f32.mrf.mxu0
  %v408 = vadd.f32 %v97, %v407
  %v409 = vpop.f32.mrf.mxu0
  %v410 = vadd.f32 %v97, %v409
  %411 = vmatmul.bf16.gmra.mxu0 %v294
  %v412 = vpop.f32.mrf.mxu0
  %v413 = vadd.f32 %v97, %v412
  %v414 = vpop.f32.mrf.mxu0
  %v415 = vadd.f32 %v97, %v414
  %416 = vmatmul.bf16.gmra.mxu0 %v297
  %v417 = vpop.f32.mrf.mxu0
  %v418 = vadd.f32 %v97, %v417
  %v419 = vpop.f32.mrf.mxu0
  %v420 = vadd.f32 %v97, %v419
  %421 = vmatmul.bf16.gmra.mxu0 %v300
  %v422 = vpop.f32.mrf.mxu0
  %v423 = vadd.f32 %v97, %v422
  %v424 = vpop.f32.mrf.mxu0
  %v425 = vadd.f32 %v97, %v424
  %426 = vmatmul.bf16.gmra.mxu0 %v303
  %v427 = vpop.f32.mrf.mxu0
  %v428 = vadd.f32 %v97, %v427
  %v429 = vpop.f32.mrf.mxu0
  %v430 = vadd.f32 %v97, %v429
  %431 = vmatmul.bf16.gmra.mxu0 %v306
  %v432 = vpop.f32.mrf.mxu0
  %v433 = vadd.f32 %v97, %v432
  %v434 = vpop.f32.mrf.mxu0
  %v435 = vadd.f32 %v97, %v434
  %436 = vmatmul.bf16.gmra.mxu0 %v309
  %v437 = vpop.f32.mrf.mxu0
  %v438 = vadd.f32 %v97, %v437
  %v439 = vpop.f32.mrf.mxu0
  %v440 = vadd.f32 %v97, %v439
  %441 = vmatmul.bf16.gmra.mxu0 %v312
  %v442 = vpop.f32.mrf.mxu0
  %v443 = vadd.f32 %v97, %v442
  %v444 = vpop.f32.mrf.mxu0
  %v445 = vadd.f32 %v97, %v444
  %446 = vmatmul.bf16.gmra.mxu0 %v315
  %v447 = vpop.f32.mrf.mxu0
  %v448 = vadd.f32 %v97, %v447
  %v449 = vpop.f32.mrf.mxu0
  %v450 = vadd.f32 %v97, %v449
  %451 = vmatmul.bf16.gmra.mxu0 %v318
  %v452 = vpop.f32.mrf.mxu0
  %v453 = vadd.f32 %v97, %v452
  %v454 = vpop.f32.mrf.mxu0
  %v455 = vadd.f32 %v97, %v454
  %456 = vmatmul.bf16.gmra.mxu0 %v321
  %v457 = vpop.f32.mrf.mxu0
  %v458 = vadd.f32 %v97, %v457
  %v459 = vpop.f32.mrf.mxu0
  %v460 = vadd.f32 %v97, %v459
  %461 = vmatmul.bf16.gmra.mxu0 %v324
  %v462 = vpop.f32.mrf.mxu0
  %v463 = vadd.f32 %v97, %v462
  %v464 = vpop.f32.mrf.mxu0
  %v465 = vadd.f32 %v97, %v464
  %466 = vmatmul.bf16.gmra.mxu0 %v327
  %v467 = vpop.f32.mrf.mxu0
  %v468 = vadd.f32 %v97, %v467
  %v469 = vpop.f32.mrf.mxu0
  %v470 = vadd.f32 %v97, %v469
  %471 = vmatmul.bf16.gmra.mxu0 %v330
  %v472 = vpop.f32.mrf.mxu0
  %v473 = vadd.f32 %v97, %v472
  %v474 = vpop.f32.mrf.mxu0
  %v475 = vadd.f32 %v97, %v474
  %476 = vmatmul.bf16.gmra.mxu0 %v333
  %v477 = vpop.f32.mrf.mxu0
  %v478 = vadd.f32 %v97, %v477
  %v479 = vpop.f32.mrf.mxu0
  %v480 = vadd.f32 %v97, %v479
  %481 = vmatmul.bf16.gmra.mxu0 %v336
  %v482 = vpop.f32.mrf.mxu0
  %v483 = vadd.f32 %v97, %v482
  %v484 = vpop.f32.mrf.mxu0
  %v485 = vadd.f32 %v97, %v484
  %486 = vmatmul.bf16.gmra.mxu0 %v339
  %v487 = vpop.f32.mrf.mxu0
  %v488 = vadd.f32 %v97, %v487
  %v489 = vpop.f32.mrf.mxu0
  %v490 = vadd.f32 %v97, %v489
  %491 = vmatmul.bf16.gmra.mxu0 %v342
  %v492 = vpop.f32.mrf.mxu0
  %v493 = vadd.f32 %v97, %v492
  %v494 = vpop.f32.mrf.mxu0
  %v495 = vadd.f32 %v97, %v494
  %496 = vmatmul.bf16.gmra.mxu0 %v345
  %v497 = vpop.f32.mrf.mxu0
  %v498 = vadd.f32 %v97, %v497
  %v499 = vpop.f32.mrf.mxu0
  %v500 = vadd.f32 %v97, %v499
  %501 = vmatmul.bf16.gmra.mxu0 %v348
  %v502 = vpop.f32.mrf.mxu0
  %v503 = vadd.f32 %v97, %v502
  %v504 = vpop.f32.mrf.mxu0
  %v505 = vadd.f32 %v97, %v504
  %506 = vmatmul.bf16.gmra.mxu0 %v351
  %v507 = vpop.f32.mrf.mxu0
  %v508 = vadd.f32 %v97, %v507
  %v509 = vpop.f32.mrf.mxu0
  %v510 = vadd.f32 %v97, %v509
  %511 = vmatmul.bf16.gmra.mxu0 %v354
  %v512 = vpop.f32.mrf.mxu0
  %v513 = vadd.f32 %v97, %v512
  %v514 = vpop.f32.mrf.mxu0
  %v515 = vadd.f32 %v97, %v514
  %516 = vmatmul.bf16.gmra.mxu0 %v357
  %v517 = vpop.f32.mrf.mxu0
  %v518 = vadd.f32 %v97, %v517
  %v519 = vpop.f32.mrf.mxu0
  %v520 = vadd.f32 %v97, %v519
  %521 = vmatmul.bf16.gmra.mxu0 %v360
  %v522 = vpop.f32.mrf.mxu0
  %v523 = vadd.f32 %v97, %v522
  %v524 = vpop.f32.mrf.mxu0
  %v525 = vadd.f32 %v97, %v524
  %526 = vmatmul.bf16.gmra.mxu0 %v363
  %v527 = vpop.f32.mrf.mxu0
  %v528 = vadd.f32 %v97, %v527
  %v529 = vpop.f32.mrf.mxu0
  %v530 = vadd.f32 %v97, %v529
  %531 = vmatmul.bf16.gmra.mxu0 %v366
  %v532 = vpop.f32.mrf.mxu0
  %v533 = vadd.f32 %v97, %v532
  %v534 = vpop.f32.mrf.mxu0
  %v535 = vadd.f32 %v97, %v534
  %536 = vdwg.mxu0
  %v537 = vmax.f32 %v378, 0.0
  %v538 = vmax.f32 %v380, 0.0
  %v539 = vmax.f32 %v383, 0.0
  %v540 = vmax.f32 %v385, 0.0
  %v541 = vmax.f32 %v388, 0.0
  %v542 = vmax.f32 %v390, 0.0
  %v543 = vmax.f32 %v393, 0.0
  %v544 = vmax.f32 %v395, 0.0
  %v545 = vmax.f32 %v398, 0.0
  %v546 = vmax.f32 %v400, 0.0
  %v547 = vmax.f32 %v403, 0.0
  %v548 = vmax.f32 %v405, 0.0
  %v549 = vmax.f32 %v408, 0.0
  %v550 = vmax.f32 %v410, 0.0
  %v551 = vmax.f32 %v413, 0.0
  %v552 = vmax.f32 %v415, 0.0
  %v553 = vmax.f32 %v418, 0.0
  %v554 = vmax.f32 %v420, 0.0
  %v555 = vmax.f32 %v423, 0.0
  %v556 = vmax.f32 %v425, 0.0
  %v557 = vmax.f32 %v428, 0.0
  %v558 = vmax.f32 %v430, 0.0
  %v559 = vmax.f32 %v433, 0.0
  %v560 = vmax.f32 %v435, 0.0
  %v561 = vmax.f32 %v438, 0.0
  %v562 = vmax.f32 %v440, 0.0
  %v563 = vmax.f32 %v443, 0.0
  %v564 = vmax.f32 %v445, 0.0
  %v565 = vmax.f32 %v448, 0.0
  %v566 = vmax.f32 %v450, 0.0
  %v567 = vmax.f32 %v453, 0.0
  %v568 = vmax.f32 %v455, 0.0
  %v569 = vmax.f32 %v458, 0.0
  %v570 = vmax.f32 %v460, 0.0
  %v571 = vmax.f32 %v463, 0.0
  %v572 = vmax.f32 %v465, 0.0
  %v573 = vmax.f32 %v468, 0.0
  %v574 = vmax.f32 %v470, 0.0
  %v575 = vmax.f32 %v473, 0.0
  %v576 = vmax.f32 %v475, 0.0
  %v577 = vmax.f32 %v478, 0.0
  %v578 = vmax.f32 %v480, 0.0
  %v579 = vmax.f32 %v483, 0.0
  %v580 = vmax.f32 %v485, 0.0
  %v581 = vmax.f32 %v488, 0.0
  %v582 = vmax.f32 %v490, 0.0
  %v583 = vmax.f32 %v493, 0.0
  %v584 = vmax.f32 %v495, 0.0
  %v585 = vmax.f32 %v498, 0.0
  %v586 = vmax.f32 %v500, 0.0
  %v587 = vmax.f32 %v503, 0.0
  %v588 = vmax.f32 %v505, 0.0
  %v589 = vmax.f32 %v508, 0.0
  %v590 = vmax.f32 %v510, 0.0
  %v591 = vmax.f32 %v513, 0.0
  %v592 = vmax.f32 %v515, 0.0
  %v593 = vmax.f32 %v518, 0.0
  %v594 = vmax.f32 %v520, 0.0
  %v595 = vmax.f32 %v523, 0.0
  %v596 = vmax.f32 %v525, 0.0
  %v597 = vmax.f32 %v528, 0.0
  %v598 = vmax.f32 %v530, 0.0
  %v599 = vmax.f32 %v533, 0.0
  %v600 = vmax.f32 %v535, 0.0
  %v601 = vpack.c.bf16 %v538, %v537
  %v602 = vpack.c.bf16 %v540, %v539
  %v603 = vpack.c.bf16 %v542, %v541
  %v604 = vpack.c.bf16 %v544, %v543
  %v605 = vpack.c.bf16 %v546, %v545
  %v606 = vpack.c.bf16 %v548, %v547
  %v607 = vpack.c.bf16 %v550, %v549
  %v608 = vpack.c.bf16 %v552, %v551
  %v609 = vpack.c.bf16 %v554, %v553
  %v610 = vpack.c.bf16 %v556, %v555
  %v611 = vpack.c.bf16 %v558, %v557
  %v612 = vpack.c.bf16 %v560, %v559
  %v613 = vpack.c.bf16 %v562, %v561
  %v614 = vpack.c.bf16 %v564, %v563
  %v615 = vpack.c.bf16 %v566, %v565
  %v616 = vpack.c.bf16 %v568, %v567
  %v617 = vpack.c.bf16 %v570, %v569
  %v618 = vpack.c.bf16 %v572, %v571
  %v619 = vpack.c.bf16 %v574, %v573
  %v620 = vpack.c.bf16 %v576, %v575
  %v621 = vpack.c.bf16 %v578, %v577
  %v622 = vpack.c.bf16 %v580, %v579
  %v623 = vpack.c.bf16 %v582, %v581
  %v624 = vpack.c.bf16 %v584, %v583
  %v625 = vpack.c.bf16 %v586, %v585
  %v626 = vpack.c.bf16 %v588, %v587
  %v627 = vpack.c.bf16 %v590, %v589
  %v628 = vpack.c.bf16 %v592, %v591
  %v629 = vpack.c.bf16 %v594, %v593
  %v630 = vpack.c.bf16 %v596, %v595
  %v631 = vpack.c.bf16 %v598, %v597
  %v632 = vpack.c.bf16 %v600, %v599
  %v633 = vld [vmem:[%s3] sm:$0xf]
  %v634 = vld [vmem:[%s3 + $0x4] sm:$0xf]
  %v635 = vld [vmem:[%s3 + $0x8] sm:$0xf]
  %v636 = vld [vmem:[%s3 + $0xc] sm:$0xf]
  %v637 = vld [vmem:[%s3 + $0x10] sm:$0xf]
  %v638 = vld [vmem:[%s3 + $0x14] sm:$0xf]
  %v639 = vld [vmem:[%s3 + $0x18] sm:$0xf]
  %v640 = vld [vmem:[%s3 + $0x1c] sm:$0xf]
  %v641 = vld [vmem:[%s3 + $0x20] sm:$0xf]
  %v642 = vld [vmem:[%s3 + $0x24] sm:$0xf]
  %v643 = vld [vmem:[%s3 + $0x28] sm:$0xf]
  %v644 = vld [vmem:[%s3 + $0x2c] sm:$0xf]
  %v645 = vld [vmem:[%s3 + $0x30] sm:$0xf]
  %v646 = vld [vmem:[%s3 + $0x34] sm:$0xf]
  %v647 = vld [vmem:[%s3 + $0x38] sm:$0xf]
  %v648 = vld [vmem:[%s3 + $0x3c] sm:$0xf]
  %v649 = vld [vmem:[%s4] sm:$0x1]
  %v651 = vperm.slane %v649, 0
  %v669 = vunpack.c.l.b16 %v633
  %v670 = vunpack.c.l.b16 %v634
  %v671 = vunpack.c.l.b16 %v635
  %v672 = vunpack.c.l.b16 %v636
  %v673 = vunpack.c.l.b16 %v637
  %v674 = vunpack.c.l.b16 %v638
  %v675 = vunpack.c.l.b16 %v639
  %v676 = vunpack.c.l.b16 %v640
  %v677 = vunpack.c.l.b16 %v641
  %v678 = vunpack.c.l.b16 %v642
  %v679 = vunpack.c.l.b16 %v643
  %v680 = vunpack.c.l.b16 %v644
  %v681 = vunpack.c.l.b16 %v645
  %v682 = vunpack.c.l.b16 %v646
  %v683 = vunpack.c.l.b16 %v647
  %v684 = vunpack.c.l.b16 %v648
  %v685 = vpack.c.b16 %v670, %v669
  %v686 = vpack.c.b16 %v672, %v671
  %v687 = vpack.c.b16 %v674, %v673
  %v688 = vpack.c.b16 %v676, %v675
  %v689 = vpack.c.b16 %v678, %v677
  %v690 = vpack.c.b16 %v680, %v679
  %v691 = vpack.c.b16 %v682, %v681
  %v692 = vpack.c.b16 %v684, %v683
  %701 = vmatpush.bf16.msra.mxu0 %v692
  %702 = vmatpush.bf16.msra.mxu0 %v691
  %703 = vmatpush.bf16.msra.mxu0 %v690
  %704 = vmatpush.bf16.msra.mxu0 %v689
  %705 = vmatpush.bf16.msra.mxu0 %v688
  %706 = vmatpush.bf16.msra.mxu0 %v687
  %707 = vmatpush.bf16.msra.mxu0 %v686
  %708 = vmatpush.bf16.msra.mxu0 %v685
  %709 = vmatmul.bf16.gmra.mxu0 %v601
  %v710 = vpop.f32.mrf.mxu0
  %v711 = vadd.f32 %v651, %v710
  %v712 = vpop.f32.mrf.mxu0
  %v713 = vadd.f32 %v651, %v712
  %714 = vmatmul.bf16.gmra.mxu0 %v602
  %v715 = vpop.f32.mrf.mxu0
  %v716 = vadd.f32 %v651, %v715
  %v717 = vpop.f32.mrf.mxu0
  %v718 = vadd.f32 %v651, %v717
  %719 = vmatmul.bf16.gmra.mxu0 %v603
  %v720 = vpop.f32.mrf.mxu0
  %v721 = vadd.f32 %v651, %v720
  %v722 = vpop.f32.mrf.mxu0
  %v723 = vadd.f32 %v651, %v722
  %724 = vmatmul.bf16.gmra.mxu0 %v604
  %v725 = vpop.f32.mrf.mxu0
  %v726 = vadd.f32 %v651, %v725
  %v727 = vpop.f32.mrf.mxu0
  %v728 = vadd.f32 %v651, %v727
  %729 = vmatmul.bf16.gmra.mxu0 %v605
  %v730 = vpop.f32.mrf.mxu0
  %v731 = vadd.f32 %v651, %v730
  %v732 = vpop.f32.mrf.mxu0
  %v733 = vadd.f32 %v651, %v732
  %734 = vmatmul.bf16.gmra.mxu0 %v606
  %v735 = vpop.f32.mrf.mxu0
  %v736 = vadd.f32 %v651, %v735
  %v737 = vpop.f32.mrf.mxu0
  %v738 = vadd.f32 %v651, %v737
  %739 = vmatmul.bf16.gmra.mxu0 %v607
  %v740 = vpop.f32.mrf.mxu0
  %v741 = vadd.f32 %v651, %v740
  %v742 = vpop.f32.mrf.mxu0
  %v743 = vadd.f32 %v651, %v742
  %744 = vmatmul.bf16.gmra.mxu0 %v608
  %v745 = vpop.f32.mrf.mxu0
  %v746 = vadd.f32 %v651, %v745
  %v747 = vpop.f32.mrf.mxu0
  %v748 = vadd.f32 %v651, %v747
  %749 = vmatmul.bf16.gmra.mxu0 %v609
  %v750 = vpop.f32.mrf.mxu0
  %v751 = vadd.f32 %v651, %v750
  %v752 = vpop.f32.mrf.mxu0
  %v753 = vadd.f32 %v651, %v752
  %754 = vmatmul.bf16.gmra.mxu0 %v610
  %v755 = vpop.f32.mrf.mxu0
  %v756 = vadd.f32 %v651, %v755
  %v757 = vpop.f32.mrf.mxu0
  %v758 = vadd.f32 %v651, %v757
  %759 = vmatmul.bf16.gmra.mxu0 %v611
  %v760 = vpop.f32.mrf.mxu0
  %v761 = vadd.f32 %v651, %v760
  %v762 = vpop.f32.mrf.mxu0
  %v763 = vadd.f32 %v651, %v762
  %764 = vmatmul.bf16.gmra.mxu0 %v612
  %v765 = vpop.f32.mrf.mxu0
  %v766 = vadd.f32 %v651, %v765
  %v767 = vpop.f32.mrf.mxu0
  %v768 = vadd.f32 %v651, %v767
  %769 = vmatmul.bf16.gmra.mxu0 %v613
  %v770 = vpop.f32.mrf.mxu0
  %v771 = vadd.f32 %v651, %v770
  %v772 = vpop.f32.mrf.mxu0
  %v773 = vadd.f32 %v651, %v772
  %774 = vmatmul.bf16.gmra.mxu0 %v614
  %v775 = vpop.f32.mrf.mxu0
  %v776 = vadd.f32 %v651, %v775
  %v777 = vpop.f32.mrf.mxu0
  %v778 = vadd.f32 %v651, %v777
  %779 = vmatmul.bf16.gmra.mxu0 %v615
  %v780 = vpop.f32.mrf.mxu0
  %v781 = vadd.f32 %v651, %v780
  %v782 = vpop.f32.mrf.mxu0
  %v783 = vadd.f32 %v651, %v782
  %784 = vmatmul.bf16.gmra.mxu0 %v616
  %v785 = vpop.f32.mrf.mxu0
  %v786 = vadd.f32 %v651, %v785
  %v787 = vpop.f32.mrf.mxu0
  %v788 = vadd.f32 %v651, %v787
  %789 = vmatmul.bf16.gmra.mxu0 %v617
  %v790 = vpop.f32.mrf.mxu0
  %v791 = vadd.f32 %v651, %v790
  %v792 = vpop.f32.mrf.mxu0
  %v793 = vadd.f32 %v651, %v792
  %794 = vmatmul.bf16.gmra.mxu0 %v618
  %v795 = vpop.f32.mrf.mxu0
  %v796 = vadd.f32 %v651, %v795
  %v797 = vpop.f32.mrf.mxu0
  %v798 = vadd.f32 %v651, %v797
  %799 = vmatmul.bf16.gmra.mxu0 %v619
  %v800 = vpop.f32.mrf.mxu0
  %v801 = vadd.f32 %v651, %v800
  %v802 = vpop.f32.mrf.mxu0
  %v803 = vadd.f32 %v651, %v802
  %804 = vmatmul.bf16.gmra.mxu0 %v620
  %v805 = vpop.f32.mrf.mxu0
  %v806 = vadd.f32 %v651, %v805
  %v807 = vpop.f32.mrf.mxu0
  %v808 = vadd.f32 %v651, %v807
  %809 = vmatmul.bf16.gmra.mxu0 %v621
  %v810 = vpop.f32.mrf.mxu0
  %v811 = vadd.f32 %v651, %v810
  %v812 = vpop.f32.mrf.mxu0
  %v813 = vadd.f32 %v651, %v812
  %814 = vmatmul.bf16.gmra.mxu0 %v622
  %v815 = vpop.f32.mrf.mxu0
  %v816 = vadd.f32 %v651, %v815
  %v817 = vpop.f32.mrf.mxu0
  %v818 = vadd.f32 %v651, %v817
  %819 = vmatmul.bf16.gmra.mxu0 %v623
  %v820 = vpop.f32.mrf.mxu0
  %v821 = vadd.f32 %v651, %v820
  %v822 = vpop.f32.mrf.mxu0
  %v823 = vadd.f32 %v651, %v822
  %824 = vmatmul.bf16.gmra.mxu0 %v624
  %v825 = vpop.f32.mrf.mxu0
  %v826 = vadd.f32 %v651, %v825
  %v827 = vpop.f32.mrf.mxu0
  %v828 = vadd.f32 %v651, %v827
  %829 = vmatmul.bf16.gmra.mxu0 %v625
  %v830 = vpop.f32.mrf.mxu0
  %v831 = vadd.f32 %v651, %v830
  %v832 = vpop.f32.mrf.mxu0
  %v833 = vadd.f32 %v651, %v832
  %834 = vmatmul.bf16.gmra.mxu0 %v626
  %v835 = vpop.f32.mrf.mxu0
  %v836 = vadd.f32 %v651, %v835
  %v837 = vpop.f32.mrf.mxu0
  %v838 = vadd.f32 %v651, %v837
  %839 = vmatmul.bf16.gmra.mxu0 %v627
  %v840 = vpop.f32.mrf.mxu0
  %v841 = vadd.f32 %v651, %v840
  %v842 = vpop.f32.mrf.mxu0
  %v843 = vadd.f32 %v651, %v842
  %844 = vmatmul.bf16.gmra.mxu0 %v628
  %v845 = vpop.f32.mrf.mxu0
  %v846 = vadd.f32 %v651, %v845
  %v847 = vpop.f32.mrf.mxu0
  %v848 = vadd.f32 %v651, %v847
  %849 = vmatmul.bf16.gmra.mxu0 %v629
  %v850 = vpop.f32.mrf.mxu0
  %v851 = vadd.f32 %v651, %v850
  %v852 = vpop.f32.mrf.mxu0
  %v853 = vadd.f32 %v651, %v852
  %854 = vmatmul.bf16.gmra.mxu0 %v630
  %v855 = vpop.f32.mrf.mxu0
  %v856 = vadd.f32 %v651, %v855
  %v857 = vpop.f32.mrf.mxu0
  %v858 = vadd.f32 %v651, %v857
  %859 = vmatmul.bf16.gmra.mxu0 %v631
  %v860 = vpop.f32.mrf.mxu0
  %v861 = vadd.f32 %v651, %v860
  %v862 = vpop.f32.mrf.mxu0
  %v863 = vadd.f32 %v651, %v862
  %864 = vmatmul.bf16.gmra.mxu0 %v632
  %v865 = vpop.f32.mrf.mxu0
  %v866 = vadd.f32 %v651, %v865
  %v867 = vpop.f32.mrf.mxu0
  %v868 = vadd.f32 %v651, %v867
  %869 = vdwg.mxu0
  %v870 = vmax.f32 %v711, 0.0
  %v871 = vmax.f32 %v713, 0.0
  %v872 = vmax.f32 %v716, 0.0
  %v873 = vmax.f32 %v718, 0.0
  %v874 = vmax.f32 %v721, 0.0
  %v875 = vmax.f32 %v723, 0.0
  %v876 = vmax.f32 %v726, 0.0
  %v877 = vmax.f32 %v728, 0.0
  %v878 = vmax.f32 %v731, 0.0
  %v879 = vmax.f32 %v733, 0.0
  %v880 = vmax.f32 %v736, 0.0
  %v881 = vmax.f32 %v738, 0.0
  %v882 = vmax.f32 %v741, 0.0
  %v883 = vmax.f32 %v743, 0.0
  %v884 = vmax.f32 %v746, 0.0
  %v885 = vmax.f32 %v748, 0.0
  %v886 = vmax.f32 %v751, 0.0
  %v887 = vmax.f32 %v753, 0.0
  %v888 = vmax.f32 %v756, 0.0
  %v889 = vmax.f32 %v758, 0.0
  %v890 = vmax.f32 %v761, 0.0
  %v891 = vmax.f32 %v763, 0.0
  %v892 = vmax.f32 %v766, 0.0
  %v893 = vmax.f32 %v768, 0.0
  %v894 = vmax.f32 %v771, 0.0
  %v895 = vmax.f32 %v773, 0.0
  %v896 = vmax.f32 %v776, 0.0
  %v897 = vmax.f32 %v778, 0.0
  %v898 = vmax.f32 %v781, 0.0
  %v899 = vmax.f32 %v783, 0.0
  %v900 = vmax.f32 %v786, 0.0
  %v901 = vmax.f32 %v788, 0.0
  %v902 = vmax.f32 %v791, 0.0
  %v903 = vmax.f32 %v793, 0.0
  %v904 = vmax.f32 %v796, 0.0
  %v905 = vmax.f32 %v798, 0.0
  %v906 = vmax.f32 %v801, 0.0
  %v907 = vmax.f32 %v803, 0.0
  %v908 = vmax.f32 %v806, 0.0
  %v909 = vmax.f32 %v808, 0.0
  %v910 = vmax.f32 %v811, 0.0
  %v911 = vmax.f32 %v813, 0.0
  %v912 = vmax.f32 %v816, 0.0
  %v913 = vmax.f32 %v818, 0.0
  %v914 = vmax.f32 %v821, 0.0
  %v915 = vmax.f32 %v823, 0.0
  %v916 = vmax.f32 %v826, 0.0
  %v917 = vmax.f32 %v828, 0.0
  %v918 = vmax.f32 %v831, 0.0
  %v919 = vmax.f32 %v833, 0.0
  %v920 = vmax.f32 %v836, 0.0
  %v921 = vmax.f32 %v838, 0.0
  %v922 = vmax.f32 %v841, 0.0
  %v923 = vmax.f32 %v843, 0.0
  %v924 = vmax.f32 %v846, 0.0
  %v925 = vmax.f32 %v848, 0.0
  %v926 = vmax.f32 %v851, 0.0
  %v927 = vmax.f32 %v853, 0.0
  %v928 = vmax.f32 %v856, 0.0
  %v929 = vmax.f32 %v858, 0.0
  %v930 = vmax.f32 %v861, 0.0
  %v931 = vmax.f32 %v863, 0.0
  %v932 = vmax.f32 %v866, 0.0
  %v933 = vmax.f32 %v868, 0.0
  %v934 = vpack.c.bf16 %v871, %v870
  %v935 = vpack.c.bf16 %v873, %v872
  %v936 = vpack.c.bf16 %v875, %v874
  %v937 = vpack.c.bf16 %v877, %v876
  %v938 = vpack.c.bf16 %v879, %v878
  %v939 = vpack.c.bf16 %v881, %v880
  %v940 = vpack.c.bf16 %v883, %v882
  %v941 = vpack.c.bf16 %v885, %v884
  %v942 = vpack.c.bf16 %v887, %v886
  %v943 = vpack.c.bf16 %v889, %v888
  %v944 = vpack.c.bf16 %v891, %v890
  %v945 = vpack.c.bf16 %v893, %v892
  %v946 = vpack.c.bf16 %v895, %v894
  %v947 = vpack.c.bf16 %v897, %v896
  %v948 = vpack.c.bf16 %v899, %v898
  %v949 = vpack.c.bf16 %v901, %v900
  %v950 = vpack.c.bf16 %v903, %v902
  %v951 = vpack.c.bf16 %v905, %v904
  %v952 = vpack.c.bf16 %v907, %v906
  %v953 = vpack.c.bf16 %v909, %v908
  %v954 = vpack.c.bf16 %v911, %v910
  %v955 = vpack.c.bf16 %v913, %v912
  %v956 = vpack.c.bf16 %v915, %v914
  %v957 = vpack.c.bf16 %v917, %v916
  %v958 = vpack.c.bf16 %v919, %v918
  %v959 = vpack.c.bf16 %v921, %v920
  %v960 = vpack.c.bf16 %v923, %v922
  %v961 = vpack.c.bf16 %v925, %v924
  %v962 = vpack.c.bf16 %v927, %v926
  %v963 = vpack.c.bf16 %v929, %v928
  %v964 = vpack.c.bf16 %v931, %v930
  %v965 = vpack.c.bf16 %v933, %v932
  %v966 = vld [vmem:[%s5] sm:$0xf]
  %v967 = vld [vmem:[%s5 + $0x4] sm:$0xf]
  %v968 = vld [vmem:[%s5 + $0x8] sm:$0xf]
  %v969 = vld [vmem:[%s5 + $0xc] sm:$0xf]
  %v970 = vld [vmem:[%s5 + $0x10] sm:$0xf]
  %v971 = vld [vmem:[%s5 + $0x14] sm:$0xf]
  %v972 = vld [vmem:[%s5 + $0x18] sm:$0xf]
  %v973 = vld [vmem:[%s5 + $0x1c] sm:$0xf]
  %v974 = vld [vmem:[%s5 + $0x20] sm:$0xf]
  %v975 = vld [vmem:[%s5 + $0x24] sm:$0xf]
  %v976 = vld [vmem:[%s5 + $0x28] sm:$0xf]
  %v977 = vld [vmem:[%s5 + $0x2c] sm:$0xf]
  %v978 = vld [vmem:[%s5 + $0x30] sm:$0xf]
  %v979 = vld [vmem:[%s5 + $0x34] sm:$0xf]
  %v980 = vld [vmem:[%s5 + $0x38] sm:$0xf]
  %v981 = vld [vmem:[%s5 + $0x3c] sm:$0xf]
  %v982 = vld [vmem:[%s6] sm:$0x1]
  %v984 = vperm.slane %v982, 0
  %v1002 = vunpack.c.l.b16 %v966
  %v1003 = vunpack.c.l.b16 %v967
  %v1004 = vunpack.c.l.b16 %v968
  %v1005 = vunpack.c.l.b16 %v969
  %v1006 = vunpack.c.l.b16 %v970
  %v1007 = vunpack.c.l.b16 %v971
  %v1008 = vunpack.c.l.b16 %v972
  %v1009 = vunpack.c.l.b16 %v973
  %v1010 = vunpack.c.l.b16 %v974
  %v1011 = vunpack.c.l.b16 %v975
  %v1012 = vunpack.c.l.b16 %v976
  %v1013 = vunpack.c.l.b16 %v977
  %v1014 = vunpack.c.l.b16 %v978
  %v1015 = vunpack.c.l.b16 %v979
  %v1016 = vunpack.c.l.b16 %v980
  %v1017 = vunpack.c.l.b16 %v981
  %v1018 = vpack.c.b16 %v1003, %v1002
  %v1019 = vpack.c.b16 %v1005, %v1004
  %v1020 = vpack.c.b16 %v1007, %v1006
  %v1021 = vpack.c.b16 %v1009, %v1008
  %v1022 = vpack.c.b16 %v1011, %v1010
  %v1023 = vpack.c.b16 %v1013, %v1012
  %v1024 = vpack.c.b16 %v1015, %v1014
  %v1025 = vpack.c.b16 %v1017, %v1016
  %1034 = vmatpush.bf16.msra.mxu0 %v1025
  %1035 = vmatpush.bf16.msra.mxu0 %v1024
  %1036 = vmatpush.bf16.msra.mxu0 %v1023
  %1037 = vmatpush.bf16.msra.mxu0 %v1022
  %1038 = vmatpush.bf16.msra.mxu0 %v1021
  %1039 = vmatpush.bf16.msra.mxu0 %v1020
  %1040 = vmatpush.bf16.msra.mxu0 %v1019
  %1041 = vmatpush.bf16.msra.mxu0 %v1018
  %1042 = vmatmul.bf16.gmra.mxu0 %v934
  %v1043 = vpop.f32.mrf.mxu0
  %v1044 = vadd.f32 %v984, %v1043
  %v1045 = vpop.f32.mrf.mxu0
  %v1046 = vadd.f32 %v984, %v1045
  %1047 = vmatmul.bf16.gmra.mxu0 %v935
  %v1048 = vpop.f32.mrf.mxu0
  %v1049 = vadd.f32 %v984, %v1048
  %v1050 = vpop.f32.mrf.mxu0
  %v1051 = vadd.f32 %v984, %v1050
  %1052 = vmatmul.bf16.gmra.mxu0 %v936
  %v1053 = vpop.f32.mrf.mxu0
  %v1054 = vadd.f32 %v984, %v1053
  %v1055 = vpop.f32.mrf.mxu0
  %v1056 = vadd.f32 %v984, %v1055
  %1057 = vmatmul.bf16.gmra.mxu0 %v937
  %v1058 = vpop.f32.mrf.mxu0
  %v1059 = vadd.f32 %v984, %v1058
  %v1060 = vpop.f32.mrf.mxu0
  %v1061 = vadd.f32 %v984, %v1060
  %1062 = vmatmul.bf16.gmra.mxu0 %v938
  %v1063 = vpop.f32.mrf.mxu0
  %v1064 = vadd.f32 %v984, %v1063
  %v1065 = vpop.f32.mrf.mxu0
  %v1066 = vadd.f32 %v984, %v1065
  %1067 = vmatmul.bf16.gmra.mxu0 %v939
  %v1068 = vpop.f32.mrf.mxu0
  %v1069 = vadd.f32 %v984, %v1068
  %v1070 = vpop.f32.mrf.mxu0
  %v1071 = vadd.f32 %v984, %v1070
  %1072 = vmatmul.bf16.gmra.mxu0 %v940
  %v1073 = vpop.f32.mrf.mxu0
  %v1074 = vadd.f32 %v984, %v1073
  %v1075 = vpop.f32.mrf.mxu0
  %v1076 = vadd.f32 %v984, %v1075
  %1077 = vmatmul.bf16.gmra.mxu0 %v941
  %v1078 = vpop.f32.mrf.mxu0
  %v1079 = vadd.f32 %v984, %v1078
  %v1080 = vpop.f32.mrf.mxu0
  %v1081 = vadd.f32 %v984, %v1080
  %1082 = vmatmul.bf16.gmra.mxu0 %v942
  %v1083 = vpop.f32.mrf.mxu0
  %v1084 = vadd.f32 %v984, %v1083
  %v1085 = vpop.f32.mrf.mxu0
  %v1086 = vadd.f32 %v984, %v1085
  %1087 = vmatmul.bf16.gmra.mxu0 %v943
  %v1088 = vpop.f32.mrf.mxu0
  %v1089 = vadd.f32 %v984, %v1088
  %v1090 = vpop.f32.mrf.mxu0
  %v1091 = vadd.f32 %v984, %v1090
  %1092 = vmatmul.bf16.gmra.mxu0 %v944
  %v1093 = vpop.f32.mrf.mxu0
  %v1094 = vadd.f32 %v984, %v1093
  %v1095 = vpop.f32.mrf.mxu0
  %v1096 = vadd.f32 %v984, %v1095
  %1097 = vmatmul.bf16.gmra.mxu0 %v945
  %v1098 = vpop.f32.mrf.mxu0
  %v1099 = vadd.f32 %v984, %v1098
  %v1100 = vpop.f32.mrf.mxu0
  %v1101 = vadd.f32 %v984, %v1100
  %1102 = vmatmul.bf16.gmra.mxu0 %v946
  %v1103 = vpop.f32.mrf.mxu0
  %v1104 = vadd.f32 %v984, %v1103
  %v1105 = vpop.f32.mrf.mxu0
  %v1106 = vadd.f32 %v984, %v1105
  %1107 = vmatmul.bf16.gmra.mxu0 %v947
  %v1108 = vpop.f32.mrf.mxu0
  %v1109 = vadd.f32 %v984, %v1108
  %v1110 = vpop.f32.mrf.mxu0
  %v1111 = vadd.f32 %v984, %v1110
  %1112 = vmatmul.bf16.gmra.mxu0 %v948
  %v1113 = vpop.f32.mrf.mxu0
  %v1114 = vadd.f32 %v984, %v1113
  %v1115 = vpop.f32.mrf.mxu0
  %v1116 = vadd.f32 %v984, %v1115
  %1117 = vmatmul.bf16.gmra.mxu0 %v949
  %v1118 = vpop.f32.mrf.mxu0
  %v1119 = vadd.f32 %v984, %v1118
  %v1120 = vpop.f32.mrf.mxu0
  %v1121 = vadd.f32 %v984, %v1120
  %1122 = vmatmul.bf16.gmra.mxu0 %v950
  %v1123 = vpop.f32.mrf.mxu0
  %v1124 = vadd.f32 %v984, %v1123
  %v1125 = vpop.f32.mrf.mxu0
  %v1126 = vadd.f32 %v984, %v1125
  %1127 = vmatmul.bf16.gmra.mxu0 %v951
  %v1128 = vpop.f32.mrf.mxu0
  %v1129 = vadd.f32 %v984, %v1128
  %v1130 = vpop.f32.mrf.mxu0
  %v1131 = vadd.f32 %v984, %v1130
  %1132 = vmatmul.bf16.gmra.mxu0 %v952
  %v1133 = vpop.f32.mrf.mxu0
  %v1134 = vadd.f32 %v984, %v1133
  %v1135 = vpop.f32.mrf.mxu0
  %v1136 = vadd.f32 %v984, %v1135
  %1137 = vmatmul.bf16.gmra.mxu0 %v953
  %v1138 = vpop.f32.mrf.mxu0
  %v1139 = vadd.f32 %v984, %v1138
  %v1140 = vpop.f32.mrf.mxu0
  %v1141 = vadd.f32 %v984, %v1140
  %1142 = vmatmul.bf16.gmra.mxu0 %v954
  %v1143 = vpop.f32.mrf.mxu0
  %v1144 = vadd.f32 %v984, %v1143
  %v1145 = vpop.f32.mrf.mxu0
  %v1146 = vadd.f32 %v984, %v1145
  %1147 = vmatmul.bf16.gmra.mxu0 %v955
  %v1148 = vpop.f32.mrf.mxu0
  %v1149 = vadd.f32 %v984, %v1148
  %v1150 = vpop.f32.mrf.mxu0
  %v1151 = vadd.f32 %v984, %v1150
  %1152 = vmatmul.bf16.gmra.mxu0 %v956
  %v1153 = vpop.f32.mrf.mxu0
  %v1154 = vadd.f32 %v984, %v1153
  %v1155 = vpop.f32.mrf.mxu0
  %v1156 = vadd.f32 %v984, %v1155
  %1157 = vmatmul.bf16.gmra.mxu0 %v957
  %v1158 = vpop.f32.mrf.mxu0
  %v1159 = vadd.f32 %v984, %v1158
  %v1160 = vpop.f32.mrf.mxu0
  %v1161 = vadd.f32 %v984, %v1160
  %1162 = vmatmul.bf16.gmra.mxu0 %v958
  %v1163 = vpop.f32.mrf.mxu0
  %v1164 = vadd.f32 %v984, %v1163
  %v1165 = vpop.f32.mrf.mxu0
  %v1166 = vadd.f32 %v984, %v1165
  %1167 = vmatmul.bf16.gmra.mxu0 %v959
  %v1168 = vpop.f32.mrf.mxu0
  %v1169 = vadd.f32 %v984, %v1168
  %v1170 = vpop.f32.mrf.mxu0
  %v1171 = vadd.f32 %v984, %v1170
  %1172 = vmatmul.bf16.gmra.mxu0 %v960
  %v1173 = vpop.f32.mrf.mxu0
  %v1174 = vadd.f32 %v984, %v1173
  %v1175 = vpop.f32.mrf.mxu0
  %v1176 = vadd.f32 %v984, %v1175
  %1177 = vmatmul.bf16.gmra.mxu0 %v961
  %v1178 = vpop.f32.mrf.mxu0
  %v1179 = vadd.f32 %v984, %v1178
  %v1180 = vpop.f32.mrf.mxu0
  %v1181 = vadd.f32 %v984, %v1180
  %1182 = vmatmul.bf16.gmra.mxu0 %v962
  %v1183 = vpop.f32.mrf.mxu0
  %v1184 = vadd.f32 %v984, %v1183
  %v1185 = vpop.f32.mrf.mxu0
  %v1186 = vadd.f32 %v984, %v1185
  %1187 = vmatmul.bf16.gmra.mxu0 %v963
  %v1188 = vpop.f32.mrf.mxu0
  %v1189 = vadd.f32 %v984, %v1188
  %v1190 = vpop.f32.mrf.mxu0
  %v1191 = vadd.f32 %v984, %v1190
  %1192 = vmatmul.bf16.gmra.mxu0 %v964
  %v1193 = vpop.f32.mrf.mxu0
  %v1194 = vadd.f32 %v984, %v1193
  %v1195 = vpop.f32.mrf.mxu0
  %v1196 = vadd.f32 %v984, %v1195
  %1197 = vmatmul.bf16.gmra.mxu0 %v965
  %v1198 = vpop.f32.mrf.mxu0
  %v1199 = vadd.f32 %v984, %v1198
  %v1200 = vpop.f32.mrf.mxu0
  %v1201 = vadd.f32 %v984, %v1200
  %1202 = vdwg.mxu0
  %v1203 = vsub.f32 0.0, %v1044
  %v1204 = vsub.f32 0.0, %v1046
  %v1205 = vsub.f32 0.0, %v1049
  %v1206 = vsub.f32 0.0, %v1051
  %v1207 = vsub.f32 0.0, %v1054
  %v1208 = vsub.f32 0.0, %v1056
  %v1209 = vsub.f32 0.0, %v1059
  %v1210 = vsub.f32 0.0, %v1061
  %v1211 = vsub.f32 0.0, %v1064
  %v1212 = vsub.f32 0.0, %v1066
  %v1213 = vsub.f32 0.0, %v1069
  %v1214 = vsub.f32 0.0, %v1071
  %v1215 = vsub.f32 0.0, %v1074
  %v1216 = vsub.f32 0.0, %v1076
  %v1217 = vsub.f32 0.0, %v1079
  %v1218 = vsub.f32 0.0, %v1081
  %v1219 = vsub.f32 0.0, %v1084
  %v1220 = vsub.f32 0.0, %v1086
  %v1221 = vsub.f32 0.0, %v1089
  %v1222 = vsub.f32 0.0, %v1091
  %v1223 = vsub.f32 0.0, %v1094
  %v1224 = vsub.f32 0.0, %v1096
  %v1225 = vsub.f32 0.0, %v1099
  %v1226 = vsub.f32 0.0, %v1101
  %v1227 = vsub.f32 0.0, %v1104
  %v1228 = vsub.f32 0.0, %v1106
  %v1229 = vsub.f32 0.0, %v1109
  %v1230 = vsub.f32 0.0, %v1111
  %v1231 = vsub.f32 0.0, %v1114
  %v1232 = vsub.f32 0.0, %v1116
  %v1233 = vsub.f32 0.0, %v1119
  %v1234 = vsub.f32 0.0, %v1121
  %v1235 = vsub.f32 0.0, %v1124
  %v1236 = vsub.f32 0.0, %v1126
  %v1237 = vsub.f32 0.0, %v1129
  %v1238 = vsub.f32 0.0, %v1131
  %v1239 = vsub.f32 0.0, %v1134
  %v1240 = vsub.f32 0.0, %v1136
  %v1241 = vsub.f32 0.0, %v1139
  %v1242 = vsub.f32 0.0, %v1141
  %v1243 = vsub.f32 0.0, %v1144
  %v1244 = vsub.f32 0.0, %v1146
  %v1245 = vsub.f32 0.0, %v1149
  %v1246 = vsub.f32 0.0, %v1151
  %v1247 = vsub.f32 0.0, %v1154
  %v1248 = vsub.f32 0.0, %v1156
  %v1249 = vsub.f32 0.0, %v1159
  %v1250 = vsub.f32 0.0, %v1161
  %v1251 = vsub.f32 0.0, %v1164
  %v1252 = vsub.f32 0.0, %v1166
  %v1253 = vsub.f32 0.0, %v1169
  %v1254 = vsub.f32 0.0, %v1171
  %v1255 = vsub.f32 0.0, %v1174
  %v1256 = vsub.f32 0.0, %v1176
  %v1257 = vsub.f32 0.0, %v1179
  %v1258 = vsub.f32 0.0, %v1181
  %v1259 = vsub.f32 0.0, %v1184
  %v1260 = vsub.f32 0.0, %v1186
  %v1261 = vsub.f32 0.0, %v1189
  %v1262 = vsub.f32 0.0, %v1191
  %v1263 = vsub.f32 0.0, %v1194
  %v1264 = vsub.f32 0.0, %v1196
  %v1265 = vsub.f32 0.0, %v1199
  %v1266 = vsub.f32 0.0, %v1201
  %v1267 = vmul.f32 %v1203, 1.442695
  %v1268 = vpow.pop %v1267
  %v1269 = vmul.f32 %v1204, 1.442695
  %v1270 = vpow.pop %v1269
  %v1271 = vmul.f32 %v1205, 1.442695
  %v1272 = vpow.pop %v1271
  %v1273 = vmul.f32 %v1206, 1.442695
  %v1274 = vpow.pop %v1273
  %v1275 = vmul.f32 %v1207, 1.442695
  %v1276 = vpow.pop %v1275
  %v1277 = vmul.f32 %v1208, 1.442695
  %v1278 = vpow.pop %v1277
  %v1279 = vmul.f32 %v1209, 1.442695
  %v1280 = vpow.pop %v1279
  %v1281 = vmul.f32 %v1210, 1.442695
  %v1282 = vpow.pop %v1281
  %v1283 = vmul.f32 %v1211, 1.442695
  %v1284 = vpow.pop %v1283
  %v1285 = vmul.f32 %v1212, 1.442695
  %v1286 = vpow.pop %v1285
  %v1287 = vmul.f32 %v1213, 1.442695
  %v1288 = vpow.pop %v1287
  %v1289 = vmul.f32 %v1214, 1.442695
  %v1290 = vpow.pop %v1289
  %v1291 = vmul.f32 %v1215, 1.442695
  %v1292 = vpow.pop %v1291
  %v1293 = vmul.f32 %v1216, 1.442695
  %v1294 = vpow.pop %v1293
  %v1295 = vmul.f32 %v1217, 1.442695
  %v1296 = vpow.pop %v1295
  %v1297 = vmul.f32 %v1218, 1.442695
  %v1298 = vpow.pop %v1297
  %v1299 = vmul.f32 %v1219, 1.442695
  %v1300 = vpow.pop %v1299
  %v1301 = vmul.f32 %v1220, 1.442695
  %v1302 = vpow.pop %v1301
  %v1303 = vmul.f32 %v1221, 1.442695
  %v1304 = vpow.pop %v1303
  %v1305 = vmul.f32 %v1222, 1.442695
  %v1306 = vpow.pop %v1305
  %v1307 = vmul.f32 %v1223, 1.442695
  %v1308 = vpow.pop %v1307
  %v1309 = vmul.f32 %v1224, 1.442695
  %v1310 = vpow.pop %v1309
  %v1311 = vmul.f32 %v1225, 1.442695
  %v1312 = vpow.pop %v1311
  %v1313 = vmul.f32 %v1226, 1.442695
  %v1314 = vpow.pop %v1313
  %v1315 = vmul.f32 %v1227, 1.442695
  %v1316 = vpow.pop %v1315
  %v1317 = vmul.f32 %v1228, 1.442695
  %v1318 = vpow.pop %v1317
  %v1319 = vmul.f32 %v1229, 1.442695
  %v1320 = vpow.pop %v1319
  %v1321 = vmul.f32 %v1230, 1.442695
  %v1322 = vpow.pop %v1321
  %v1323 = vmul.f32 %v1231, 1.442695
  %v1324 = vpow.pop %v1323
  %v1325 = vmul.f32 %v1232, 1.442695
  %v1326 = vpow.pop %v1325
  %v1327 = vmul.f32 %v1233, 1.442695
  %v1328 = vpow.pop %v1327
  %v1329 = vmul.f32 %v1234, 1.442695
  %v1330 = vpow.pop %v1329
  %v1331 = vmul.f32 %v1235, 1.442695
  %v1332 = vpow.pop %v1331
  %v1333 = vmul.f32 %v1236, 1.442695
  %v1334 = vpow.pop %v1333
  %v1335 = vmul.f32 %v1237, 1.442695
  %v1336 = vpow.pop %v1335
  %v1337 = vmul.f32 %v1238, 1.442695
  %v1338 = vpow.pop %v1337
  %v1339 = vmul.f32 %v1239, 1.442695
  %v1340 = vpow.pop %v1339
  %v1341 = vmul.f32 %v1240, 1.442695
  %v1342 = vpow.pop %v1341
  %v1343 = vmul.f32 %v1241, 1.442695
  %v1344 = vpow.pop %v1343
  %v1345 = vmul.f32 %v1242, 1.442695
  %v1346 = vpow.pop %v1345
  %v1347 = vmul.f32 %v1243, 1.442695
  %v1348 = vpow.pop %v1347
  %v1349 = vmul.f32 %v1244, 1.442695
  %v1350 = vpow.pop %v1349
  %v1351 = vmul.f32 %v1245, 1.442695
  %v1352 = vpow.pop %v1351
  %v1353 = vmul.f32 %v1246, 1.442695
  %v1354 = vpow.pop %v1353
  %v1355 = vmul.f32 %v1247, 1.442695
  %v1356 = vpow.pop %v1355
  %v1357 = vmul.f32 %v1248, 1.442695
  %v1358 = vpow.pop %v1357
  %v1359 = vmul.f32 %v1249, 1.442695
  %v1360 = vpow.pop %v1359
  %v1361 = vmul.f32 %v1250, 1.442695
  %v1362 = vpow.pop %v1361
  %v1363 = vmul.f32 %v1251, 1.442695
  %v1364 = vpow.pop %v1363
  %v1365 = vmul.f32 %v1252, 1.442695
  %v1366 = vpow.pop %v1365
  %v1367 = vmul.f32 %v1253, 1.442695
  %v1368 = vpow.pop %v1367
  %v1369 = vmul.f32 %v1254, 1.442695
  %v1370 = vpow.pop %v1369
  %v1371 = vmul.f32 %v1255, 1.442695
  %v1372 = vpow.pop %v1371
  %v1373 = vmul.f32 %v1256, 1.442695
  %v1374 = vpow.pop %v1373
  %v1375 = vmul.f32 %v1257, 1.442695
  %v1376 = vpow.pop %v1375
  %v1377 = vmul.f32 %v1258, 1.442695
  %v1378 = vpow.pop %v1377
  %v1379 = vmul.f32 %v1259, 1.442695
  %v1380 = vpow.pop %v1379
  %v1381 = vmul.f32 %v1260, 1.442695
  %v1382 = vpow.pop %v1381
  %v1383 = vmul.f32 %v1261, 1.442695
  %v1384 = vpow.pop %v1383
  %v1385 = vmul.f32 %v1262, 1.442695
  %v1386 = vpow.pop %v1385
  %v1387 = vmul.f32 %v1263, 1.442695
  %v1388 = vpow.pop %v1387
  %v1389 = vmul.f32 %v1264, 1.442695
  %v1390 = vpow.pop %v1389
  %v1391 = vmul.f32 %v1265, 1.442695
  %v1392 = vpow.pop %v1391
  %v1393 = vmul.f32 %v1266, 1.442695
  %v1394 = vpow.pop %v1393
  %v1395 = vadd.f32 %v1268, 1.0
  %v1396 = vadd.f32 %v1270, 1.0
  %v1397 = vadd.f32 %v1272, 1.0
  %v1398 = vadd.f32 %v1274, 1.0
  %v1399 = vadd.f32 %v1276, 1.0
  %v1400 = vadd.f32 %v1278, 1.0
  %v1401 = vadd.f32 %v1280, 1.0
  %v1402 = vadd.f32 %v1282, 1.0
  %v1403 = vadd.f32 %v1284, 1.0
  %v1404 = vadd.f32 %v1286, 1.0
  %v1405 = vadd.f32 %v1288, 1.0
  %v1406 = vadd.f32 %v1290, 1.0
  %v1407 = vadd.f32 %v1292, 1.0
  %v1408 = vadd.f32 %v1294, 1.0
  %v1409 = vadd.f32 %v1296, 1.0
  %v1410 = vadd.f32 %v1298, 1.0
  %v1411 = vadd.f32 %v1300, 1.0
  %v1412 = vadd.f32 %v1302, 1.0
  %v1413 = vadd.f32 %v1304, 1.0
  %v1414 = vadd.f32 %v1306, 1.0
  %v1415 = vadd.f32 %v1308, 1.0
  %v1416 = vadd.f32 %v1310, 1.0
  %v1417 = vadd.f32 %v1312, 1.0
  %v1418 = vadd.f32 %v1314, 1.0
  %v1419 = vadd.f32 %v1316, 1.0
  %v1420 = vadd.f32 %v1318, 1.0
  %v1421 = vadd.f32 %v1320, 1.0
  %v1422 = vadd.f32 %v1322, 1.0
  %v1423 = vadd.f32 %v1324, 1.0
  %v1424 = vadd.f32 %v1326, 1.0
  %v1425 = vadd.f32 %v1328, 1.0
  %v1426 = vadd.f32 %v1330, 1.0
  %v1427 = vadd.f32 %v1332, 1.0
  %v1428 = vadd.f32 %v1334, 1.0
  %v1429 = vadd.f32 %v1336, 1.0
  %v1430 = vadd.f32 %v1338, 1.0
  %v1431 = vadd.f32 %v1340, 1.0
  %v1432 = vadd.f32 %v1342, 1.0
  %v1433 = vadd.f32 %v1344, 1.0
  %v1434 = vadd.f32 %v1346, 1.0
  %v1435 = vadd.f32 %v1348, 1.0
  %v1436 = vadd.f32 %v1350, 1.0
  %v1437 = vadd.f32 %v1352, 1.0
  %v1438 = vadd.f32 %v1354, 1.0
  %v1439 = vadd.f32 %v1356, 1.0
  %v1440 = vadd.f32 %v1358, 1.0
  %v1441 = vadd.f32 %v1360, 1.0
  %v1442 = vadd.f32 %v1362, 1.0
  %v1443 = vadd.f32 %v1364, 1.0
  %v1444 = vadd.f32 %v1366, 1.0
  %v1445 = vadd.f32 %v1368, 1.0
  %v1446 = vadd.f32 %v1370, 1.0
  %v1447 = vadd.f32 %v1372, 1.0
  %v1448 = vadd.f32 %v1374, 1.0
  %v1449 = vadd.f32 %v1376, 1.0
  %v1450 = vadd.f32 %v1378, 1.0
  %v1451 = vadd.f32 %v1380, 1.0
  %v1452 = vadd.f32 %v1382, 1.0
  %v1453 = vadd.f32 %v1384, 1.0
  %v1454 = vadd.f32 %v1386, 1.0
  %v1455 = vadd.f32 %v1388, 1.0
  %v1456 = vadd.f32 %v1390, 1.0
  %v1457 = vadd.f32 %v1392, 1.0
  %v1458 = vadd.f32 %v1394, 1.0
  %v1459 = vrcp.pop %v1395
  %v1460 = vmul.f32 %v1395, %v1459
  %v1461 = vsub.f32 1.0, %v1460
  %v1462 = vmul.f32 %v1459, %v1461
  %v1463 = vadd.f32 %v1459, %v1462
  %vm1464 = vweird.f32 %v1395
  %vm1465 = vweird.f32 %v1459
  %vm1466 = vmor %vm1464, %vm1465
  %v1467 = vsel %vm1466, %v1459, %v1463
  %v1468 = vand.u32 2147483647, %v1395
  %vm1469 = vcmp.eq.f32.partialorder %v1468, 8.507059e+37
  %v1470 = vand.u32 %v1395, 2147483648
  %v1471 = vor.u32 1.1754944e-38, %v1470
  %v1472 = vsel %vm1469, %v1471, %v1467
  %v1473 = vmul.f32 1.0, %v1472
  %v1474 = vrcp.pop %v1396
  %v1475 = vmul.f32 %v1396, %v1474
  %v1476 = vsub.f32 1.0, %v1475
  %v1477 = vmul.f32 %v1474, %v1476
  %v1478 = vadd.f32 %v1474, %v1477
  %vm1479 = vweird.f32 %v1396
  %vm1480 = vweird.f32 %v1474
  %vm1481 = vmor %vm1479, %vm1480
  %v1482 = vsel %vm1481, %v1474, %v1478
  %v1483 = vand.u32 2147483647, %v1396
  %vm1484 = vcmp.eq.f32.partialorder %v1483, 8.507059e+37
  %v1485 = vand.u32 %v1396, 2147483648
  %v1486 = vor.u32 1.1754944e-38, %v1485
  %v1487 = vsel %vm1484, %v1486, %v1482
  %v1488 = vmul.f32 1.0, %v1487
  %v1489 = vrcp.pop %v1397
  %v1490 = vmul.f32 %v1397, %v1489
  %v1491 = vsub.f32 1.0, %v1490
  %v1492 = vmul.f32 %v1489, %v1491
  %v1493 = vadd.f32 %v1489, %v1492
  %vm1494 = vweird.f32 %v1397
  %vm1495 = vweird.f32 %v1489
  %vm1496 = vmor %vm1494, %vm1495
  %v1497 = vsel %vm1496, %v1489, %v1493
  %v1498 = vand.u32 2147483647, %v1397
  %vm1499 = vcmp.eq.f32.partialorder %v1498, 8.507059e+37
  %v1500 = vand.u32 %v1397, 2147483648
  %v1501 = vor.u32 1.1754944e-38, %v1500
  %v1502 = vsel %vm1499, %v1501, %v1497
  %v1503 = vmul.f32 1.0, %v1502
  %v1504 = vrcp.pop %v1398
  %v1505 = vmul.f32 %v1398, %v1504
  %v1506 = vsub.f32 1.0, %v1505
  %v1507 = vmul.f32 %v1504, %v1506
  %v1508 = vadd.f32 %v1504, %v1507
  %vm1509 = vweird.f32 %v1398
  %vm1510 = vweird.f32 %v1504
  %vm1511 = vmor %vm1509, %vm1510
  %v1512 = vsel %vm1511, %v1504, %v1508
  %v1513 = vand.u32 2147483647, %v1398
  %vm1514 = vcmp.eq.f32.partialorder %v1513, 8.507059e+37
  %v1515 = vand.u32 %v1398, 2147483648
  %v1516 = vor.u32 1.1754944e-38, %v1515
  %v1517 = vsel %vm1514, %v1516, %v1512
  %v1518 = vmul.f32 1.0, %v1517
  %v1519 = vrcp.pop %v1399
  %v1520 = vmul.f32 %v1399, %v1519
  %v1521 = vsub.f32 1.0, %v1520
  %v1522 = vmul.f32 %v1519, %v1521
  %v1523 = vadd.f32 %v1519, %v1522
  %vm1524 = vweird.f32 %v1399
  %vm1525 = vweird.f32 %v1519
  %vm1526 = vmor %vm1524, %vm1525
  %v1527 = vsel %vm1526, %v1519, %v1523
  %v1528 = vand.u32 2147483647, %v1399
  %vm1529 = vcmp.eq.f32.partialorder %v1528, 8.507059e+37
  %v1530 = vand.u32 %v1399, 2147483648
  %v1531 = vor.u32 1.1754944e-38, %v1530
  %v1532 = vsel %vm1529, %v1531, %v1527
  %v1533 = vmul.f32 1.0, %v1532
  %v1534 = vrcp.pop %v1400
  %v1535 = vmul.f32 %v1400, %v1534
  %v1536 = vsub.f32 1.0, %v1535
  %v1537 = vmul.f32 %v1534, %v1536
  %v1538 = vadd.f32 %v1534, %v1537
  %vm1539 = vweird.f32 %v1400
  %vm1540 = vweird.f32 %v1534
  %vm1541 = vmor %vm1539, %vm1540
  %v1542 = vsel %vm1541, %v1534, %v1538
  %v1543 = vand.u32 2147483647, %v1400
  %vm1544 = vcmp.eq.f32.partialorder %v1543, 8.507059e+37
  %v1545 = vand.u32 %v1400, 2147483648
  %v1546 = vor.u32 1.1754944e-38, %v1545
  %v1547 = vsel %vm1544, %v1546, %v1542
  %v1548 = vmul.f32 1.0, %v1547
  %v1549 = vrcp.pop %v1401
  %v1550 = vmul.f32 %v1401, %v1549
  %v1551 = vsub.f32 1.0, %v1550
  %v1552 = vmul.f32 %v1549, %v1551
  %v1553 = vadd.f32 %v1549, %v1552
  %vm1554 = vweird.f32 %v1401
  %vm1555 = vweird.f32 %v1549
  %vm1556 = vmor %vm1554, %vm1555
  %v1557 = vsel %vm1556, %v1549, %v1553
  %v1558 = vand.u32 2147483647, %v1401
  %vm1559 = vcmp.eq.f32.partialorder %v1558, 8.507059e+37
  %v1560 = vand.u32 %v1401, 2147483648
  %v1561 = vor.u32 1.1754944e-38, %v1560
  %v1562 = vsel %vm1559, %v1561, %v1557
  %v1563 = vmul.f32 1.0, %v1562
  %v1564 = vrcp.pop %v1402
  %v1565 = vmul.f32 %v1402, %v1564
  %v1566 = vsub.f32 1.0, %v1565
  %v1567 = vmul.f32 %v1564, %v1566
  %v1568 = vadd.f32 %v1564, %v1567
  %vm1569 = vweird.f32 %v1402
  %vm1570 = vweird.f32 %v1564
  %vm1571 = vmor %vm1569, %vm1570
  %v1572 = vsel %vm1571, %v1564, %v1568
  %v1573 = vand.u32 2147483647, %v1402
  %vm1574 = vcmp.eq.f32.partialorder %v1573, 8.507059e+37
  %v1575 = vand.u32 %v1402, 2147483648
  %v1576 = vor.u32 1.1754944e-38, %v1575
  %v1577 = vsel %vm1574, %v1576, %v1572
  %v1578 = vmul.f32 1.0, %v1577
  %v1579 = vrcp.pop %v1403
  %v1580 = vmul.f32 %v1403, %v1579
  %v1581 = vsub.f32 1.0, %v1580
  %v1582 = vmul.f32 %v1579, %v1581
  %v1583 = vadd.f32 %v1579, %v1582
  %vm1584 = vweird.f32 %v1403
  %vm1585 = vweird.f32 %v1579
  %vm1586 = vmor %vm1584, %vm1585
  %v1587 = vsel %vm1586, %v1579, %v1583
  %v1588 = vand.u32 2147483647, %v1403
  %vm1589 = vcmp.eq.f32.partialorder %v1588, 8.507059e+37
  %v1590 = vand.u32 %v1403, 2147483648
  %v1591 = vor.u32 1.1754944e-38, %v1590
  %v1592 = vsel %vm1589, %v1591, %v1587
  %v1593 = vmul.f32 1.0, %v1592
  %v1594 = vrcp.pop %v1404
  %v1595 = vmul.f32 %v1404, %v1594
  %v1596 = vsub.f32 1.0, %v1595
  %v1597 = vmul.f32 %v1594, %v1596
  %v1598 = vadd.f32 %v1594, %v1597
  %vm1599 = vweird.f32 %v1404
  %vm1600 = vweird.f32 %v1594
  %vm1601 = vmor %vm1599, %vm1600
  %v1602 = vsel %vm1601, %v1594, %v1598
  %v1603 = vand.u32 2147483647, %v1404
  %vm1604 = vcmp.eq.f32.partialorder %v1603, 8.507059e+37
  %v1605 = vand.u32 %v1404, 2147483648
  %v1606 = vor.u32 1.1754944e-38, %v1605
  %v1607 = vsel %vm1604, %v1606, %v1602
  %v1608 = vmul.f32 1.0, %v1607
  %v1609 = vrcp.pop %v1405
  %v1610 = vmul.f32 %v1405, %v1609
  %v1611 = vsub.f32 1.0, %v1610
  %v1612 = vmul.f32 %v1609, %v1611
  %v1613 = vadd.f32 %v1609, %v1612
  %vm1614 = vweird.f32 %v1405
  %vm1615 = vweird.f32 %v1609
  %vm1616 = vmor %vm1614, %vm1615
  %v1617 = vsel %vm1616, %v1609, %v1613
  %v1618 = vand.u32 2147483647, %v1405
  %vm1619 = vcmp.eq.f32.partialorder %v1618, 8.507059e+37
  %v1620 = vand.u32 %v1405, 2147483648
  %v1621 = vor.u32 1.1754944e-38, %v1620
  %v1622 = vsel %vm1619, %v1621, %v1617
  %v1623 = vmul.f32 1.0, %v1622
  %v1624 = vrcp.pop %v1406
  %v1625 = vmul.f32 %v1406, %v1624
  %v1626 = vsub.f32 1.0, %v1625
  %v1627 = vmul.f32 %v1624, %v1626
  %v1628 = vadd.f32 %v1624, %v1627
  %vm1629 = vweird.f32 %v1406
  %vm1630 = vweird.f32 %v1624
  %vm1631 = vmor %vm1629, %vm1630
  %v1632 = vsel %vm1631, %v1624, %v1628
  %v1633 = vand.u32 2147483647, %v1406
  %vm1634 = vcmp.eq.f32.partialorder %v1633, 8.507059e+37
  %v1635 = vand.u32 %v1406, 2147483648
  %v1636 = vor.u32 1.1754944e-38, %v1635
  %v1637 = vsel %vm1634, %v1636, %v1632
  %v1638 = vmul.f32 1.0, %v1637
  %v1639 = vrcp.pop %v1407
  %v1640 = vmul.f32 %v1407, %v1639
  %v1641 = vsub.f32 1.0, %v1640
  %v1642 = vmul.f32 %v1639, %v1641
  %v1643 = vadd.f32 %v1639, %v1642
  %vm1644 = vweird.f32 %v1407
  %vm1645 = vweird.f32 %v1639
  %vm1646 = vmor %vm1644, %vm1645
  %v1647 = vsel %vm1646, %v1639, %v1643
  %v1648 = vand.u32 2147483647, %v1407
  %vm1649 = vcmp.eq.f32.partialorder %v1648, 8.507059e+37
  %v1650 = vand.u32 %v1407, 2147483648
  %v1651 = vor.u32 1.1754944e-38, %v1650
  %v1652 = vsel %vm1649, %v1651, %v1647
  %v1653 = vmul.f32 1.0, %v1652
  %v1654 = vrcp.pop %v1408
  %v1655 = vmul.f32 %v1408, %v1654
  %v1656 = vsub.f32 1.0, %v1655
  %v1657 = vmul.f32 %v1654, %v1656
  %v1658 = vadd.f32 %v1654, %v1657
  %vm1659 = vweird.f32 %v1408
  %vm1660 = vweird.f32 %v1654
  %vm1661 = vmor %vm1659, %vm1660
  %v1662 = vsel %vm1661, %v1654, %v1658
  %v1663 = vand.u32 2147483647, %v1408
  %vm1664 = vcmp.eq.f32.partialorder %v1663, 8.507059e+37
  %v1665 = vand.u32 %v1408, 2147483648
  %v1666 = vor.u32 1.1754944e-38, %v1665
  %v1667 = vsel %vm1664, %v1666, %v1662
  %v1668 = vmul.f32 1.0, %v1667
  %v1669 = vrcp.pop %v1409
  %v1670 = vmul.f32 %v1409, %v1669
  %v1671 = vsub.f32 1.0, %v1670
  %v1672 = vmul.f32 %v1669, %v1671
  %v1673 = vadd.f32 %v1669, %v1672
  %vm1674 = vweird.f32 %v1409
  %vm1675 = vweird.f32 %v1669
  %vm1676 = vmor %vm1674, %vm1675
  %v1677 = vsel %vm1676, %v1669, %v1673
  %v1678 = vand.u32 2147483647, %v1409
  %vm1679 = vcmp.eq.f32.partialorder %v1678, 8.507059e+37
  %v1680 = vand.u32 %v1409, 2147483648
  %v1681 = vor.u32 1.1754944e-38, %v1680
  %v1682 = vsel %vm1679, %v1681, %v1677
  %v1683 = vmul.f32 1.0, %v1682
  %v1684 = vrcp.pop %v1410
  %v1685 = vmul.f32 %v1410, %v1684
  %v1686 = vsub.f32 1.0, %v1685
  %v1687 = vmul.f32 %v1684, %v1686
  %v1688 = vadd.f32 %v1684, %v1687
  %vm1689 = vweird.f32 %v1410
  %vm1690 = vweird.f32 %v1684
  %vm1691 = vmor %vm1689, %vm1690
  %v1692 = vsel %vm1691, %v1684, %v1688
  %v1693 = vand.u32 2147483647, %v1410
  %vm1694 = vcmp.eq.f32.partialorder %v1693, 8.507059e+37
  %v1695 = vand.u32 %v1410, 2147483648
  %v1696 = vor.u32 1.1754944e-38, %v1695
  %v1697 = vsel %vm1694, %v1696, %v1692
  %v1698 = vmul.f32 1.0, %v1697
  %v1699 = vrcp.pop %v1411
  %v1700 = vmul.f32 %v1411, %v1699
  %v1701 = vsub.f32 1.0, %v1700
  %v1702 = vmul.f32 %v1699, %v1701
  %v1703 = vadd.f32 %v1699, %v1702
  %vm1704 = vweird.f32 %v1411
  %vm1705 = vweird.f32 %v1699
  %vm1706 = vmor %vm1704, %vm1705
  %v1707 = vsel %vm1706, %v1699, %v1703
  %v1708 = vand.u32 2147483647, %v1411
  %vm1709 = vcmp.eq.f32.partialorder %v1708, 8.507059e+37
  %v1710 = vand.u32 %v1411, 2147483648
  %v1711 = vor.u32 1.1754944e-38, %v1710
  %v1712 = vsel %vm1709, %v1711, %v1707
  %v1713 = vmul.f32 1.0, %v1712
  %v1714 = vrcp.pop %v1412
  %v1715 = vmul.f32 %v1412, %v1714
  %v1716 = vsub.f32 1.0, %v1715
  %v1717 = vmul.f32 %v1714, %v1716
  %v1718 = vadd.f32 %v1714, %v1717
  %vm1719 = vweird.f32 %v1412
  %vm1720 = vweird.f32 %v1714
  %vm1721 = vmor %vm1719, %vm1720
  %v1722 = vsel %vm1721, %v1714, %v1718
  %v1723 = vand.u32 2147483647, %v1412
  %vm1724 = vcmp.eq.f32.partialorder %v1723, 8.507059e+37
  %v1725 = vand.u32 %v1412, 2147483648
  %v1726 = vor.u32 1.1754944e-38, %v1725
  %v1727 = vsel %vm1724, %v1726, %v1722
  %v1728 = vmul.f32 1.0, %v1727
  %v1729 = vrcp.pop %v1413
  %v1730 = vmul.f32 %v1413, %v1729
  %v1731 = vsub.f32 1.0, %v1730
  %v1732 = vmul.f32 %v1729, %v1731
  %v1733 = vadd.f32 %v1729, %v1732
  %vm1734 = vweird.f32 %v1413
  %vm1735 = vweird.f32 %v1729
  %vm1736 = vmor %vm1734, %vm1735
  %v1737 = vsel %vm1736, %v1729, %v1733
  %v1738 = vand.u32 2147483647, %v1413
  %vm1739 = vcmp.eq.f32.partialorder %v1738, 8.507059e+37
  %v1740 = vand.u32 %v1413, 2147483648
  %v1741 = vor.u32 1.1754944e-38, %v1740
  %v1742 = vsel %vm1739, %v1741, %v1737
  %v1743 = vmul.f32 1.0, %v1742
  %v1744 = vrcp.pop %v1414
  %v1745 = vmul.f32 %v1414, %v1744
  %v1746 = vsub.f32 1.0, %v1745
  %v1747 = vmul.f32 %v1744, %v1746
  %v1748 = vadd.f32 %v1744, %v1747
  %vm1749 = vweird.f32 %v1414
  %vm1750 = vweird.f32 %v1744
  %vm1751 = vmor %vm1749, %vm1750
  %v1752 = vsel %vm1751, %v1744, %v1748
  %v1753 = vand.u32 2147483647, %v1414
  %vm1754 = vcmp.eq.f32.partialorder %v1753, 8.507059e+37
  %v1755 = vand.u32 %v1414, 2147483648
  %v1756 = vor.u32 1.1754944e-38, %v1755
  %v1757 = vsel %vm1754, %v1756, %v1752
  %v1758 = vmul.f32 1.0, %v1757
  %v1759 = vrcp.pop %v1415
  %v1760 = vmul.f32 %v1415, %v1759
  %v1761 = vsub.f32 1.0, %v1760
  %v1762 = vmul.f32 %v1759, %v1761
  %v1763 = vadd.f32 %v1759, %v1762
  %vm1764 = vweird.f32 %v1415
  %vm1765 = vweird.f32 %v1759
  %vm1766 = vmor %vm1764, %vm1765
  %v1767 = vsel %vm1766, %v1759, %v1763
  %v1768 = vand.u32 2147483647, %v1415
  %vm1769 = vcmp.eq.f32.partialorder %v1768, 8.507059e+37
  %v1770 = vand.u32 %v1415, 2147483648
  %v1771 = vor.u32 1.1754944e-38, %v1770
  %v1772 = vsel %vm1769, %v1771, %v1767
  %v1773 = vmul.f32 1.0, %v1772
  %v1774 = vrcp.pop %v1416
  %v1775 = vmul.f32 %v1416, %v1774
  %v1776 = vsub.f32 1.0, %v1775
  %v1777 = vmul.f32 %v1774, %v1776
  %v1778 = vadd.f32 %v1774, %v1777
  %vm1779 = vweird.f32 %v1416
  %vm1780 = vweird.f32 %v1774
  %vm1781 = vmor %vm1779, %vm1780
  %v1782 = vsel %vm1781, %v1774, %v1778
  %v1783 = vand.u32 2147483647, %v1416
  %vm1784 = vcmp.eq.f32.partialorder %v1783, 8.507059e+37
  %v1785 = vand.u32 %v1416, 2147483648
  %v1786 = vor.u32 1.1754944e-38, %v1785
  %v1787 = vsel %vm1784, %v1786, %v1782
  %v1788 = vmul.f32 1.0, %v1787
  %v1789 = vrcp.pop %v1417
  %v1790 = vmul.f32 %v1417, %v1789
  %v1791 = vsub.f32 1.0, %v1790
  %v1792 = vmul.f32 %v1789, %v1791
  %v1793 = vadd.f32 %v1789, %v1792
  %vm1794 = vweird.f32 %v1417
  %vm1795 = vweird.f32 %v1789
  %vm1796 = vmor %vm1794, %vm1795
  %v1797 = vsel %vm1796, %v1789, %v1793
  %v1798 = vand.u32 2147483647, %v1417
  %vm1799 = vcmp.eq.f32.partialorder %v1798, 8.507059e+37
  %v1800 = vand.u32 %v1417, 2147483648
  %v1801 = vor.u32 1.1754944e-38, %v1800
  %v1802 = vsel %vm1799, %v1801, %v1797
  %v1803 = vmul.f32 1.0, %v1802
  %v1804 = vrcp.pop %v1418
  %v1805 = vmul.f32 %v1418, %v1804
  %v1806 = vsub.f32 1.0, %v1805
  %v1807 = vmul.f32 %v1804, %v1806
  %v1808 = vadd.f32 %v1804, %v1807
  %vm1809 = vweird.f32 %v1418
  %vm1810 = vweird.f32 %v1804
  %vm1811 = vmor %vm1809, %vm1810
  %v1812 = vsel %vm1811, %v1804, %v1808
  %v1813 = vand.u32 2147483647, %v1418
  %vm1814 = vcmp.eq.f32.partialorder %v1813, 8.507059e+37
  %v1815 = vand.u32 %v1418, 2147483648
  %v1816 = vor.u32 1.1754944e-38, %v1815
  %v1817 = vsel %vm1814, %v1816, %v1812
  %v1818 = vmul.f32 1.0, %v1817
  %v1819 = vrcp.pop %v1419
  %v1820 = vmul.f32 %v1419, %v1819
  %v1821 = vsub.f32 1.0, %v1820
  %v1822 = vmul.f32 %v1819, %v1821
  %v1823 = vadd.f32 %v1819, %v1822
  %vm1824 = vweird.f32 %v1419
  %vm1825 = vweird.f32 %v1819
  %vm1826 = vmor %vm1824, %vm1825
  %v1827 = vsel %vm1826, %v1819, %v1823
  %v1828 = vand.u32 2147483647, %v1419
  %vm1829 = vcmp.eq.f32.partialorder %v1828, 8.507059e+37
  %v1830 = vand.u32 %v1419, 2147483648
  %v1831 = vor.u32 1.1754944e-38, %v1830
  %v1832 = vsel %vm1829, %v1831, %v1827
  %v1833 = vmul.f32 1.0, %v1832
  %v1834 = vrcp.pop %v1420
  %v1835 = vmul.f32 %v1420, %v1834
  %v1836 = vsub.f32 1.0, %v1835
  %v1837 = vmul.f32 %v1834, %v1836
  %v1838 = vadd.f32 %v1834, %v1837
  %vm1839 = vweird.f32 %v1420
  %vm1840 = vweird.f32 %v1834
  %vm1841 = vmor %vm1839, %vm1840
  %v1842 = vsel %vm1841, %v1834, %v1838
  %v1843 = vand.u32 2147483647, %v1420
  %vm1844 = vcmp.eq.f32.partialorder %v1843, 8.507059e+37
  %v1845 = vand.u32 %v1420, 2147483648
  %v1846 = vor.u32 1.1754944e-38, %v1845
  %v1847 = vsel %vm1844, %v1846, %v1842
  %v1848 = vmul.f32 1.0, %v1847
  %v1849 = vrcp.pop %v1421
  %v1850 = vmul.f32 %v1421, %v1849
  %v1851 = vsub.f32 1.0, %v1850
  %v1852 = vmul.f32 %v1849, %v1851
  %v1853 = vadd.f32 %v1849, %v1852
  %vm1854 = vweird.f32 %v1421
  %vm1855 = vweird.f32 %v1849
  %vm1856 = vmor %vm1854, %vm1855
  %v1857 = vsel %vm1856, %v1849, %v1853
  %v1858 = vand.u32 2147483647, %v1421
  %vm1859 = vcmp.eq.f32.partialorder %v1858, 8.507059e+37
  %v1860 = vand.u32 %v1421, 2147483648
  %v1861 = vor.u32 1.1754944e-38, %v1860
  %v1862 = vsel %vm1859, %v1861, %v1857
  %v1863 = vmul.f32 1.0, %v1862
  %v1864 = vrcp.pop %v1422
  %v1865 = vmul.f32 %v1422, %v1864
  %v1866 = vsub.f32 1.0, %v1865
  %v1867 = vmul.f32 %v1864, %v1866
  %v1868 = vadd.f32 %v1864, %v1867
  %vm1869 = vweird.f32 %v1422
  %vm1870 = vweird.f32 %v1864
  %vm1871 = vmor %vm1869, %vm1870
  %v1872 = vsel %vm1871, %v1864, %v1868
  %v1873 = vand.u32 2147483647, %v1422
  %vm1874 = vcmp.eq.f32.partialorder %v1873, 8.507059e+37
  %v1875 = vand.u32 %v1422, 2147483648
  %v1876 = vor.u32 1.1754944e-38, %v1875
  %v1877 = vsel %vm1874, %v1876, %v1872
  %v1878 = vmul.f32 1.0, %v1877
  %v1879 = vrcp.pop %v1423
  %v1880 = vmul.f32 %v1423, %v1879
  %v1881 = vsub.f32 1.0, %v1880
  %v1882 = vmul.f32 %v1879, %v1881
  %v1883 = vadd.f32 %v1879, %v1882
  %vm1884 = vweird.f32 %v1423
  %vm1885 = vweird.f32 %v1879
  %vm1886 = vmor %vm1884, %vm1885
  %v1887 = vsel %vm1886, %v1879, %v1883
  %v1888 = vand.u32 2147483647, %v1423
  %vm1889 = vcmp.eq.f32.partialorder %v1888, 8.507059e+37
  %v1890 = vand.u32 %v1423, 2147483648
  %v1891 = vor.u32 1.1754944e-38, %v1890
  %v1892 = vsel %vm1889, %v1891, %v1887
  %v1893 = vmul.f32 1.0, %v1892
  %v1894 = vrcp.pop %v1424
  %v1895 = vmul.f32 %v1424, %v1894
  %v1896 = vsub.f32 1.0, %v1895
  %v1897 = vmul.f32 %v1894, %v1896
  %v1898 = vadd.f32 %v1894, %v1897
  %vm1899 = vweird.f32 %v1424
  %vm1900 = vweird.f32 %v1894
  %vm1901 = vmor %vm1899, %vm1900
  %v1902 = vsel %vm1901, %v1894, %v1898
  %v1903 = vand.u32 2147483647, %v1424
  %vm1904 = vcmp.eq.f32.partialorder %v1903, 8.507059e+37
  %v1905 = vand.u32 %v1424, 2147483648
  %v1906 = vor.u32 1.1754944e-38, %v1905
  %v1907 = vsel %vm1904, %v1906, %v1902
  %v1908 = vmul.f32 1.0, %v1907
  %v1909 = vrcp.pop %v1425
  %v1910 = vmul.f32 %v1425, %v1909
  %v1911 = vsub.f32 1.0, %v1910
  %v1912 = vmul.f32 %v1909, %v1911
  %v1913 = vadd.f32 %v1909, %v1912
  %vm1914 = vweird.f32 %v1425
  %vm1915 = vweird.f32 %v1909
  %vm1916 = vmor %vm1914, %vm1915
  %v1917 = vsel %vm1916, %v1909, %v1913
  %v1918 = vand.u32 2147483647, %v1425
  %vm1919 = vcmp.eq.f32.partialorder %v1918, 8.507059e+37
  %v1920 = vand.u32 %v1425, 2147483648
  %v1921 = vor.u32 1.1754944e-38, %v1920
  %v1922 = vsel %vm1919, %v1921, %v1917
  %v1923 = vmul.f32 1.0, %v1922
  %v1924 = vrcp.pop %v1426
  %v1925 = vmul.f32 %v1426, %v1924
  %v1926 = vsub.f32 1.0, %v1925
  %v1927 = vmul.f32 %v1924, %v1926
  %v1928 = vadd.f32 %v1924, %v1927
  %vm1929 = vweird.f32 %v1426
  %vm1930 = vweird.f32 %v1924
  %vm1931 = vmor %vm1929, %vm1930
  %v1932 = vsel %vm1931, %v1924, %v1928
  %v1933 = vand.u32 2147483647, %v1426
  %vm1934 = vcmp.eq.f32.partialorder %v1933, 8.507059e+37
  %v1935 = vand.u32 %v1426, 2147483648
  %v1936 = vor.u32 1.1754944e-38, %v1935
  %v1937 = vsel %vm1934, %v1936, %v1932
  %v1938 = vmul.f32 1.0, %v1937
  %v1939 = vrcp.pop %v1427
  %v1940 = vmul.f32 %v1427, %v1939
  %v1941 = vsub.f32 1.0, %v1940
  %v1942 = vmul.f32 %v1939, %v1941
  %v1943 = vadd.f32 %v1939, %v1942
  %vm1944 = vweird.f32 %v1427
  %vm1945 = vweird.f32 %v1939
  %vm1946 = vmor %vm1944, %vm1945
  %v1947 = vsel %vm1946, %v1939, %v1943
  %v1948 = vand.u32 2147483647, %v1427
  %vm1949 = vcmp.eq.f32.partialorder %v1948, 8.507059e+37
  %v1950 = vand.u32 %v1427, 2147483648
  %v1951 = vor.u32 1.1754944e-38, %v1950
  %v1952 = vsel %vm1949, %v1951, %v1947
  %v1953 = vmul.f32 1.0, %v1952
  %v1954 = vrcp.pop %v1428
  %v1955 = vmul.f32 %v1428, %v1954
  %v1956 = vsub.f32 1.0, %v1955
  %v1957 = vmul.f32 %v1954, %v1956
  %v1958 = vadd.f32 %v1954, %v1957
  %vm1959 = vweird.f32 %v1428
  %vm1960 = vweird.f32 %v1954
  %vm1961 = vmor %vm1959, %vm1960
  %v1962 = vsel %vm1961, %v1954, %v1958
  %v1963 = vand.u32 2147483647, %v1428
  %vm1964 = vcmp.eq.f32.partialorder %v1963, 8.507059e+37
  %v1965 = vand.u32 %v1428, 2147483648
  %v1966 = vor.u32 1.1754944e-38, %v1965
  %v1967 = vsel %vm1964, %v1966, %v1962
  %v1968 = vmul.f32 1.0, %v1967
  %v1969 = vrcp.pop %v1429
  %v1970 = vmul.f32 %v1429, %v1969
  %v1971 = vsub.f32 1.0, %v1970
  %v1972 = vmul.f32 %v1969, %v1971
  %v1973 = vadd.f32 %v1969, %v1972
  %vm1974 = vweird.f32 %v1429
  %vm1975 = vweird.f32 %v1969
  %vm1976 = vmor %vm1974, %vm1975
  %v1977 = vsel %vm1976, %v1969, %v1973
  %v1978 = vand.u32 2147483647, %v1429
  %vm1979 = vcmp.eq.f32.partialorder %v1978, 8.507059e+37
  %v1980 = vand.u32 %v1429, 2147483648
  %v1981 = vor.u32 1.1754944e-38, %v1980
  %v1982 = vsel %vm1979, %v1981, %v1977
  %v1983 = vmul.f32 1.0, %v1982
  %v1984 = vrcp.pop %v1430
  %v1985 = vmul.f32 %v1430, %v1984
  %v1986 = vsub.f32 1.0, %v1985
  %v1987 = vmul.f32 %v1984, %v1986
  %v1988 = vadd.f32 %v1984, %v1987
  %vm1989 = vweird.f32 %v1430
  %vm1990 = vweird.f32 %v1984
  %vm1991 = vmor %vm1989, %vm1990
  %v1992 = vsel %vm1991, %v1984, %v1988
  %v1993 = vand.u32 2147483647, %v1430
  %vm1994 = vcmp.eq.f32.partialorder %v1993, 8.507059e+37
  %v1995 = vand.u32 %v1430, 2147483648
  %v1996 = vor.u32 1.1754944e-38, %v1995
  %v1997 = vsel %vm1994, %v1996, %v1992
  %v1998 = vmul.f32 1.0, %v1997
  %v1999 = vrcp.pop %v1431
  %v2000 = vmul.f32 %v1431, %v1999
  %v2001 = vsub.f32 1.0, %v2000
  %v2002 = vmul.f32 %v1999, %v2001
  %v2003 = vadd.f32 %v1999, %v2002
  %vm2004 = vweird.f32 %v1431
  %vm2005 = vweird.f32 %v1999
  %vm2006 = vmor %vm2004, %vm2005
  %v2007 = vsel %vm2006, %v1999, %v2003
  %v2008 = vand.u32 2147483647, %v1431
  %vm2009 = vcmp.eq.f32.partialorder %v2008, 8.507059e+37
  %v2010 = vand.u32 %v1431, 2147483648
  %v2011 = vor.u32 1.1754944e-38, %v2010
  %v2012 = vsel %vm2009, %v2011, %v2007
  %v2013 = vmul.f32 1.0, %v2012
  %v2014 = vrcp.pop %v1432
  %v2015 = vmul.f32 %v1432, %v2014
  %v2016 = vsub.f32 1.0, %v2015
  %v2017 = vmul.f32 %v2014, %v2016
  %v2018 = vadd.f32 %v2014, %v2017
  %vm2019 = vweird.f32 %v1432
  %vm2020 = vweird.f32 %v2014
  %vm2021 = vmor %vm2019, %vm2020
  %v2022 = vsel %vm2021, %v2014, %v2018
  %v2023 = vand.u32 2147483647, %v1432
  %vm2024 = vcmp.eq.f32.partialorder %v2023, 8.507059e+37
  %v2025 = vand.u32 %v1432, 2147483648
  %v2026 = vor.u32 1.1754944e-38, %v2025
  %v2027 = vsel %vm2024, %v2026, %v2022
  %v2028 = vmul.f32 1.0, %v2027
  %v2029 = vrcp.pop %v1433
  %v2030 = vmul.f32 %v1433, %v2029
  %v2031 = vsub.f32 1.0, %v2030
  %v2032 = vmul.f32 %v2029, %v2031
  %v2033 = vadd.f32 %v2029, %v2032
  %vm2034 = vweird.f32 %v1433
  %vm2035 = vweird.f32 %v2029
  %vm2036 = vmor %vm2034, %vm2035
  %v2037 = vsel %vm2036, %v2029, %v2033
  %v2038 = vand.u32 2147483647, %v1433
  %vm2039 = vcmp.eq.f32.partialorder %v2038, 8.507059e+37
  %v2040 = vand.u32 %v1433, 2147483648
  %v2041 = vor.u32 1.1754944e-38, %v2040
  %v2042 = vsel %vm2039, %v2041, %v2037
  %v2043 = vmul.f32 1.0, %v2042
  %v2044 = vrcp.pop %v1434
  %v2045 = vmul.f32 %v1434, %v2044
  %v2046 = vsub.f32 1.0, %v2045
  %v2047 = vmul.f32 %v2044, %v2046
  %v2048 = vadd.f32 %v2044, %v2047
  %vm2049 = vweird.f32 %v1434
  %vm2050 = vweird.f32 %v2044
  %vm2051 = vmor %vm2049, %vm2050
  %v2052 = vsel %vm2051, %v2044, %v2048
  %v2053 = vand.u32 2147483647, %v1434
  %vm2054 = vcmp.eq.f32.partialorder %v2053, 8.507059e+37
  %v2055 = vand.u32 %v1434, 2147483648
  %v2056 = vor.u32 1.1754944e-38, %v2055
  %v2057 = vsel %vm2054, %v2056, %v2052
  %v2058 = vmul.f32 1.0, %v2057
  %v2059 = vrcp.pop %v1435
  %v2060 = vmul.f32 %v1435, %v2059
  %v2061 = vsub.f32 1.0, %v2060
  %v2062 = vmul.f32 %v2059, %v2061
  %v2063 = vadd.f32 %v2059, %v2062
  %vm2064 = vweird.f32 %v1435
  %vm2065 = vweird.f32 %v2059
  %vm2066 = vmor %vm2064, %vm2065
  %v2067 = vsel %vm2066, %v2059, %v2063
  %v2068 = vand.u32 2147483647, %v1435
  %vm2069 = vcmp.eq.f32.partialorder %v2068, 8.507059e+37
  %v2070 = vand.u32 %v1435, 2147483648
  %v2071 = vor.u32 1.1754944e-38, %v2070
  %v2072 = vsel %vm2069, %v2071, %v2067
  %v2073 = vmul.f32 1.0, %v2072
  %v2074 = vrcp.pop %v1436
  %v2075 = vmul.f32 %v1436, %v2074
  %v2076 = vsub.f32 1.0, %v2075
  %v2077 = vmul.f32 %v2074, %v2076
  %v2078 = vadd.f32 %v2074, %v2077
  %vm2079 = vweird.f32 %v1436
  %vm2080 = vweird.f32 %v2074
  %vm2081 = vmor %vm2079, %vm2080
  %v2082 = vsel %vm2081, %v2074, %v2078
  %v2083 = vand.u32 2147483647, %v1436
  %vm2084 = vcmp.eq.f32.partialorder %v2083, 8.507059e+37
  %v2085 = vand.u32 %v1436, 2147483648
  %v2086 = vor.u32 1.1754944e-38, %v2085
  %v2087 = vsel %vm2084, %v2086, %v2082
  %v2088 = vmul.f32 1.0, %v2087
  %v2089 = vrcp.pop %v1437
  %v2090 = vmul.f32 %v1437, %v2089
  %v2091 = vsub.f32 1.0, %v2090
  %v2092 = vmul.f32 %v2089, %v2091
  %v2093 = vadd.f32 %v2089, %v2092
  %vm2094 = vweird.f32 %v1437
  %vm2095 = vweird.f32 %v2089
  %vm2096 = vmor %vm2094, %vm2095
  %v2097 = vsel %vm2096, %v2089, %v2093
  %v2098 = vand.u32 2147483647, %v1437
  %vm2099 = vcmp.eq.f32.partialorder %v2098, 8.507059e+37
  %v2100 = vand.u32 %v1437, 2147483648
  %v2101 = vor.u32 1.1754944e-38, %v2100
  %v2102 = vsel %vm2099, %v2101, %v2097
  %v2103 = vmul.f32 1.0, %v2102
  %v2104 = vrcp.pop %v1438
  %v2105 = vmul.f32 %v1438, %v2104
  %v2106 = vsub.f32 1.0, %v2105
  %v2107 = vmul.f32 %v2104, %v2106
  %v2108 = vadd.f32 %v2104, %v2107
  %vm2109 = vweird.f32 %v1438
  %vm2110 = vweird.f32 %v2104
  %vm2111 = vmor %vm2109, %vm2110
  %v2112 = vsel %vm2111, %v2104, %v2108
  %v2113 = vand.u32 2147483647, %v1438
  %vm2114 = vcmp.eq.f32.partialorder %v2113, 8.507059e+37
  %v2115 = vand.u32 %v1438, 2147483648
  %v2116 = vor.u32 1.1754944e-38, %v2115
  %v2117 = vsel %vm2114, %v2116, %v2112
  %v2118 = vmul.f32 1.0, %v2117
  %v2119 = vrcp.pop %v1439
  %v2120 = vmul.f32 %v1439, %v2119
  %v2121 = vsub.f32 1.0, %v2120
  %v2122 = vmul.f32 %v2119, %v2121
  %v2123 = vadd.f32 %v2119, %v2122
  %vm2124 = vweird.f32 %v1439
  %vm2125 = vweird.f32 %v2119
  %vm2126 = vmor %vm2124, %vm2125
  %v2127 = vsel %vm2126, %v2119, %v2123
  %v2128 = vand.u32 2147483647, %v1439
  %vm2129 = vcmp.eq.f32.partialorder %v2128, 8.507059e+37
  %v2130 = vand.u32 %v1439, 2147483648
  %v2131 = vor.u32 1.1754944e-38, %v2130
  %v2132 = vsel %vm2129, %v2131, %v2127
  %v2133 = vmul.f32 1.0, %v2132
  %v2134 = vrcp.pop %v1440
  %v2135 = vmul.f32 %v1440, %v2134
  %v2136 = vsub.f32 1.0, %v2135
  %v2137 = vmul.f32 %v2134, %v2136
  %v2138 = vadd.f32 %v2134, %v2137
  %vm2139 = vweird.f32 %v1440
  %vm2140 = vweird.f32 %v2134
  %vm2141 = vmor %vm2139, %vm2140
  %v2142 = vsel %vm2141, %v2134, %v2138
  %v2143 = vand.u32 2147483647, %v1440
  %vm2144 = vcmp.eq.f32.partialorder %v2143, 8.507059e+37
  %v2145 = vand.u32 %v1440, 2147483648
  %v2146 = vor.u32 1.1754944e-38, %v2145
  %v2147 = vsel %vm2144, %v2146, %v2142
  %v2148 = vmul.f32 1.0, %v2147
  %v2149 = vrcp.pop %v1441
  %v2150 = vmul.f32 %v1441, %v2149
  %v2151 = vsub.f32 1.0, %v2150
  %v2152 = vmul.f32 %v2149, %v2151
  %v2153 = vadd.f32 %v2149, %v2152
  %vm2154 = vweird.f32 %v1441
  %vm2155 = vweird.f32 %v2149
  %vm2156 = vmor %vm2154, %vm2155
  %v2157 = vsel %vm2156, %v2149, %v2153
  %v2158 = vand.u32 2147483647, %v1441
  %vm2159 = vcmp.eq.f32.partialorder %v2158, 8.507059e+37
  %v2160 = vand.u32 %v1441, 2147483648
  %v2161 = vor.u32 1.1754944e-38, %v2160
  %v2162 = vsel %vm2159, %v2161, %v2157
  %v2163 = vmul.f32 1.0, %v2162
  %v2164 = vrcp.pop %v1442
  %v2165 = vmul.f32 %v1442, %v2164
  %v2166 = vsub.f32 1.0, %v2165
  %v2167 = vmul.f32 %v2164, %v2166
  %v2168 = vadd.f32 %v2164, %v2167
  %vm2169 = vweird.f32 %v1442
  %vm2170 = vweird.f32 %v2164
  %vm2171 = vmor %vm2169, %vm2170
  %v2172 = vsel %vm2171, %v2164, %v2168
  %v2173 = vand.u32 2147483647, %v1442
  %vm2174 = vcmp.eq.f32.partialorder %v2173, 8.507059e+37
  %v2175 = vand.u32 %v1442, 2147483648
  %v2176 = vor.u32 1.1754944e-38, %v2175
  %v2177 = vsel %vm2174, %v2176, %v2172
  %v2178 = vmul.f32 1.0, %v2177
  %v2179 = vrcp.pop %v1443
  %v2180 = vmul.f32 %v1443, %v2179
  %v2181 = vsub.f32 1.0, %v2180
  %v2182 = vmul.f32 %v2179, %v2181
  %v2183 = vadd.f32 %v2179, %v2182
  %vm2184 = vweird.f32 %v1443
  %vm2185 = vweird.f32 %v2179
  %vm2186 = vmor %vm2184, %vm2185
  %v2187 = vsel %vm2186, %v2179, %v2183
  %v2188 = vand.u32 2147483647, %v1443
  %vm2189 = vcmp.eq.f32.partialorder %v2188, 8.507059e+37
  %v2190 = vand.u32 %v1443, 2147483648
  %v2191 = vor.u32 1.1754944e-38, %v2190
  %v2192 = vsel %vm2189, %v2191, %v2187
  %v2193 = vmul.f32 1.0, %v2192
  %v2194 = vrcp.pop %v1444
  %v2195 = vmul.f32 %v1444, %v2194
  %v2196 = vsub.f32 1.0, %v2195
  %v2197 = vmul.f32 %v2194, %v2196
  %v2198 = vadd.f32 %v2194, %v2197
  %vm2199 = vweird.f32 %v1444
  %vm2200 = vweird.f32 %v2194
  %vm2201 = vmor %vm2199, %vm2200
  %v2202 = vsel %vm2201, %v2194, %v2198
  %v2203 = vand.u32 2147483647, %v1444
  %vm2204 = vcmp.eq.f32.partialorder %v2203, 8.507059e+37
  %v2205 = vand.u32 %v1444, 2147483648
  %v2206 = vor.u32 1.1754944e-38, %v2205
  %v2207 = vsel %vm2204, %v2206, %v2202
  %v2208 = vmul.f32 1.0, %v2207
  %v2209 = vrcp.pop %v1445
  %v2210 = vmul.f32 %v1445, %v2209
  %v2211 = vsub.f32 1.0, %v2210
  %v2212 = vmul.f32 %v2209, %v2211
  %v2213 = vadd.f32 %v2209, %v2212
  %vm2214 = vweird.f32 %v1445
  %vm2215 = vweird.f32 %v2209
  %vm2216 = vmor %vm2214, %vm2215
  %v2217 = vsel %vm2216, %v2209, %v2213
  %v2218 = vand.u32 2147483647, %v1445
  %vm2219 = vcmp.eq.f32.partialorder %v2218, 8.507059e+37
  %v2220 = vand.u32 %v1445, 2147483648
  %v2221 = vor.u32 1.1754944e-38, %v2220
  %v2222 = vsel %vm2219, %v2221, %v2217
  %v2223 = vmul.f32 1.0, %v2222
  %v2224 = vrcp.pop %v1446
  %v2225 = vmul.f32 %v1446, %v2224
  %v2226 = vsub.f32 1.0, %v2225
  %v2227 = vmul.f32 %v2224, %v2226
  %v2228 = vadd.f32 %v2224, %v2227
  %vm2229 = vweird.f32 %v1446
  %vm2230 = vweird.f32 %v2224
  %vm2231 = vmor %vm2229, %vm2230
  %v2232 = vsel %vm2231, %v2224, %v2228
  %v2233 = vand.u32 2147483647, %v1446
  %vm2234 = vcmp.eq.f32.partialorder %v2233, 8.507059e+37
  %v2235 = vand.u32 %v1446, 2147483648
  %v2236 = vor.u32 1.1754944e-38, %v2235
  %v2237 = vsel %vm2234, %v2236, %v2232
  %v2238 = vmul.f32 1.0, %v2237
  %v2239 = vrcp.pop %v1447
  %v2240 = vmul.f32 %v1447, %v2239
  %v2241 = vsub.f32 1.0, %v2240
  %v2242 = vmul.f32 %v2239, %v2241
  %v2243 = vadd.f32 %v2239, %v2242
  %vm2244 = vweird.f32 %v1447
  %vm2245 = vweird.f32 %v2239
  %vm2246 = vmor %vm2244, %vm2245
  %v2247 = vsel %vm2246, %v2239, %v2243
  %v2248 = vand.u32 2147483647, %v1447
  %vm2249 = vcmp.eq.f32.partialorder %v2248, 8.507059e+37
  %v2250 = vand.u32 %v1447, 2147483648
  %v2251 = vor.u32 1.1754944e-38, %v2250
  %v2252 = vsel %vm2249, %v2251, %v2247
  %v2253 = vmul.f32 1.0, %v2252
  %v2254 = vrcp.pop %v1448
  %v2255 = vmul.f32 %v1448, %v2254
  %v2256 = vsub.f32 1.0, %v2255
  %v2257 = vmul.f32 %v2254, %v2256
  %v2258 = vadd.f32 %v2254, %v2257
  %vm2259 = vweird.f32 %v1448
  %vm2260 = vweird.f32 %v2254
  %vm2261 = vmor %vm2259, %vm2260
  %v2262 = vsel %vm2261, %v2254, %v2258
  %v2263 = vand.u32 2147483647, %v1448
  %vm2264 = vcmp.eq.f32.partialorder %v2263, 8.507059e+37
  %v2265 = vand.u32 %v1448, 2147483648
  %v2266 = vor.u32 1.1754944e-38, %v2265
  %v2267 = vsel %vm2264, %v2266, %v2262
  %v2268 = vmul.f32 1.0, %v2267
  %v2269 = vrcp.pop %v1449
  %v2270 = vmul.f32 %v1449, %v2269
  %v2271 = vsub.f32 1.0, %v2270
  %v2272 = vmul.f32 %v2269, %v2271
  %v2273 = vadd.f32 %v2269, %v2272
  %vm2274 = vweird.f32 %v1449
  %vm2275 = vweird.f32 %v2269
  %vm2276 = vmor %vm2274, %vm2275
  %v2277 = vsel %vm2276, %v2269, %v2273
  %v2278 = vand.u32 2147483647, %v1449
  %vm2279 = vcmp.eq.f32.partialorder %v2278, 8.507059e+37
  %v2280 = vand.u32 %v1449, 2147483648
  %v2281 = vor.u32 1.1754944e-38, %v2280
  %v2282 = vsel %vm2279, %v2281, %v2277
  %v2283 = vmul.f32 1.0, %v2282
  %v2284 = vrcp.pop %v1450
  %v2285 = vmul.f32 %v1450, %v2284
  %v2286 = vsub.f32 1.0, %v2285
  %v2287 = vmul.f32 %v2284, %v2286
  %v2288 = vadd.f32 %v2284, %v2287
  %vm2289 = vweird.f32 %v1450
  %vm2290 = vweird.f32 %v2284
  %vm2291 = vmor %vm2289, %vm2290
  %v2292 = vsel %vm2291, %v2284, %v2288
  %v2293 = vand.u32 2147483647, %v1450
  %vm2294 = vcmp.eq.f32.partialorder %v2293, 8.507059e+37
  %v2295 = vand.u32 %v1450, 2147483648
  %v2296 = vor.u32 1.1754944e-38, %v2295
  %v2297 = vsel %vm2294, %v2296, %v2292
  %v2298 = vmul.f32 1.0, %v2297
  %v2299 = vrcp.pop %v1451
  %v2300 = vmul.f32 %v1451, %v2299
  %v2301 = vsub.f32 1.0, %v2300
  %v2302 = vmul.f32 %v2299, %v2301
  %v2303 = vadd.f32 %v2299, %v2302
  %vm2304 = vweird.f32 %v1451
  %vm2305 = vweird.f32 %v2299
  %vm2306 = vmor %vm2304, %vm2305
  %v2307 = vsel %vm2306, %v2299, %v2303
  %v2308 = vand.u32 2147483647, %v1451
  %vm2309 = vcmp.eq.f32.partialorder %v2308, 8.507059e+37
  %v2310 = vand.u32 %v1451, 2147483648
  %v2311 = vor.u32 1.1754944e-38, %v2310
  %v2312 = vsel %vm2309, %v2311, %v2307
  %v2313 = vmul.f32 1.0, %v2312
  %v2314 = vrcp.pop %v1452
  %v2315 = vmul.f32 %v1452, %v2314
  %v2316 = vsub.f32 1.0, %v2315
  %v2317 = vmul.f32 %v2314, %v2316
  %v2318 = vadd.f32 %v2314, %v2317
  %vm2319 = vweird.f32 %v1452
  %vm2320 = vweird.f32 %v2314
  %vm2321 = vmor %vm2319, %vm2320
  %v2322 = vsel %vm2321, %v2314, %v2318
  %v2323 = vand.u32 2147483647, %v1452
  %vm2324 = vcmp.eq.f32.partialorder %v2323, 8.507059e+37
  %v2325 = vand.u32 %v1452, 2147483648
  %v2326 = vor.u32 1.1754944e-38, %v2325
  %v2327 = vsel %vm2324, %v2326, %v2322
  %v2328 = vmul.f32 1.0, %v2327
  %v2329 = vrcp.pop %v1453
  %v2330 = vmul.f32 %v1453, %v2329
  %v2331 = vsub.f32 1.0, %v2330
  %v2332 = vmul.f32 %v2329, %v2331
  %v2333 = vadd.f32 %v2329, %v2332
  %vm2334 = vweird.f32 %v1453
  %vm2335 = vweird.f32 %v2329
  %vm2336 = vmor %vm2334, %vm2335
  %v2337 = vsel %vm2336, %v2329, %v2333
  %v2338 = vand.u32 2147483647, %v1453
  %vm2339 = vcmp.eq.f32.partialorder %v2338, 8.507059e+37
  %v2340 = vand.u32 %v1453, 2147483648
  %v2341 = vor.u32 1.1754944e-38, %v2340
  %v2342 = vsel %vm2339, %v2341, %v2337
  %v2343 = vmul.f32 1.0, %v2342
  %v2344 = vrcp.pop %v1454
  %v2345 = vmul.f32 %v1454, %v2344
  %v2346 = vsub.f32 1.0, %v2345
  %v2347 = vmul.f32 %v2344, %v2346
  %v2348 = vadd.f32 %v2344, %v2347
  %vm2349 = vweird.f32 %v1454
  %vm2350 = vweird.f32 %v2344
  %vm2351 = vmor %vm2349, %vm2350
  %v2352 = vsel %vm2351, %v2344, %v2348
  %v2353 = vand.u32 2147483647, %v1454
  %vm2354 = vcmp.eq.f32.partialorder %v2353, 8.507059e+37
  %v2355 = vand.u32 %v1454, 2147483648
  %v2356 = vor.u32 1.1754944e-38, %v2355
  %v2357 = vsel %vm2354, %v2356, %v2352
  %v2358 = vmul.f32 1.0, %v2357
  %v2359 = vrcp.pop %v1455
  %v2360 = vmul.f32 %v1455, %v2359
  %v2361 = vsub.f32 1.0, %v2360
  %v2362 = vmul.f32 %v2359, %v2361
  %v2363 = vadd.f32 %v2359, %v2362
  %vm2364 = vweird.f32 %v1455
  %vm2365 = vweird.f32 %v2359
  %vm2366 = vmor %vm2364, %vm2365
  %v2367 = vsel %vm2366, %v2359, %v2363
  %v2368 = vand.u32 2147483647, %v1455
  %vm2369 = vcmp.eq.f32.partialorder %v2368, 8.507059e+37
  %v2370 = vand.u32 %v1455, 2147483648
  %v2371 = vor.u32 1.1754944e-38, %v2370
  %v2372 = vsel %vm2369, %v2371, %v2367
  %v2373 = vmul.f32 1.0, %v2372
  %v2374 = vrcp.pop %v1456
  %v2375 = vmul.f32 %v1456, %v2374
  %v2376 = vsub.f32 1.0, %v2375
  %v2377 = vmul.f32 %v2374, %v2376
  %v2378 = vadd.f32 %v2374, %v2377
  %vm2379 = vweird.f32 %v1456
  %vm2380 = vweird.f32 %v2374
  %vm2381 = vmor %vm2379, %vm2380
  %v2382 = vsel %vm2381, %v2374, %v2378
  %v2383 = vand.u32 2147483647, %v1456
  %vm2384 = vcmp.eq.f32.partialorder %v2383, 8.507059e+37
  %v2385 = vand.u32 %v1456, 2147483648
  %v2386 = vor.u32 1.1754944e-38, %v2385
  %v2387 = vsel %vm2384, %v2386, %v2382
  %v2388 = vmul.f32 1.0, %v2387
  %v2389 = vrcp.pop %v1457
  %v2390 = vmul.f32 %v1457, %v2389
  %v2391 = vsub.f32 1.0, %v2390
  %v2392 = vmul.f32 %v2389, %v2391
  %v2393 = vadd.f32 %v2389, %v2392
  %vm2394 = vweird.f32 %v1457
  %vm2395 = vweird.f32 %v2389
  %vm2396 = vmor %vm2394, %vm2395
  %v2397 = vsel %vm2396, %v2389, %v2393
  %v2398 = vand.u32 2147483647, %v1457
  %vm2399 = vcmp.eq.f32.partialorder %v2398, 8.507059e+37
  %v2400 = vand.u32 %v1457, 2147483648
  %v2401 = vor.u32 1.1754944e-38, %v2400
  %v2402 = vsel %vm2399, %v2401, %v2397
  %v2403 = vmul.f32 1.0, %v2402
  %v2404 = vrcp.pop %v1458
  %v2405 = vmul.f32 %v1458, %v2404
  %v2406 = vsub.f32 1.0, %v2405
  %v2407 = vmul.f32 %v2404, %v2406
  %v2408 = vadd.f32 %v2404, %v2407
  %vm2409 = vweird.f32 %v1458
  %vm2410 = vweird.f32 %v2404
  %vm2411 = vmor %vm2409, %vm2410
  %v2412 = vsel %vm2411, %v2404, %v2408
  %v2413 = vand.u32 2147483647, %v1458
  %vm2414 = vcmp.eq.f32.partialorder %v2413, 8.507059e+37
  %v2415 = vand.u32 %v1458, 2147483648
  %v2416 = vor.u32 1.1754944e-38, %v2415
  %v2417 = vsel %vm2414, %v2416, %v2412
  %v2418 = vmul.f32 1.0, %v2417
  %2419 = vst [vmem:[%s7] sm:$0xff] %v1473
  %2420 = vst [vmem:[%s7 + $0x8] sm:$0xff] %v1488
  %2421 = vst [vmem:[%s7 + $0x10] sm:$0xff] %v1503
  %2422 = vst [vmem:[%s7 + $0x18] sm:$0xff] %v1518
  %2423 = vst [vmem:[%s7 + $0x20] sm:$0xff] %v1533
  %2424 = vst [vmem:[%s7 + $0x28] sm:$0xff] %v1548
  %2425 = vst [vmem:[%s7 + $0x30] sm:$0xff] %v1563
  %2426 = vst [vmem:[%s7 + $0x38] sm:$0xff] %v1578
  %2427 = vst [vmem:[%s7 + $0x40] sm:$0xff] %v1593
  %2428 = vst [vmem:[%s7 + $0x48] sm:$0xff] %v1608
  %2429 = vst [vmem:[%s7 + $0x50] sm:$0xff] %v1623
  %2430 = vst [vmem:[%s7 + $0x58] sm:$0xff] %v1638
  %2431 = vst [vmem:[%s7 + $0x60] sm:$0xff] %v1653
  %2432 = vst [vmem:[%s7 + $0x68] sm:$0xff] %v1668
  %2433 = vst [vmem:[%s7 + $0x70] sm:$0xff] %v1683
  %2434 = vst [vmem:[%s7 + $0x78] sm:$0xff] %v1698
  %2435 = vst [vmem:[%s7 + $0x80] sm:$0xff] %v1713
  %2436 = vst [vmem:[%s7 + $0x88] sm:$0xff] %v1728
  %2437 = vst [vmem:[%s7 + $0x90] sm:$0xff] %v1743
  %2438 = vst [vmem:[%s7 + $0x98] sm:$0xff] %v1758
  %2439 = vst [vmem:[%s7 + $0xa0] sm:$0xff] %v1773
  %2440 = vst [vmem:[%s7 + $0xa8] sm:$0xff] %v1788
  %2441 = vst [vmem:[%s7 + $0xb0] sm:$0xff] %v1803
  %2442 = vst [vmem:[%s7 + $0xb8] sm:$0xff] %v1818
  %2443 = vst [vmem:[%s7 + $0xc0] sm:$0xff] %v1833
  %2444 = vst [vmem:[%s7 + $0xc8] sm:$0xff] %v1848
  %2445 = vst [vmem:[%s7 + $0xd0] sm:$0xff] %v1863
  %2446 = vst [vmem:[%s7 + $0xd8] sm:$0xff] %v1878
  %2447 = vst [vmem:[%s7 + $0xe0] sm:$0xff] %v1893
  %2448 = vst [vmem:[%s7 + $0xe8] sm:$0xff] %v1908
  %2449 = vst [vmem:[%s7 + $0xf0] sm:$0xff] %v1923
  %2450 = vst [vmem:[%s7 + $0xf8] sm:$0xff] %v1938
  %2451 = vst [vmem:[%s7 + $0x100] sm:$0xff] %v1953
  %2452 = vst [vmem:[%s7 + $0x108] sm:$0xff] %v1968
  %2453 = vst [vmem:[%s7 + $0x110] sm:$0xff] %v1983
  %2454 = vst [vmem:[%s7 + $0x118] sm:$0xff] %v1998
  %2455 = vst [vmem:[%s7 + $0x120] sm:$0xff] %v2013
  %2456 = vst [vmem:[%s7 + $0x128] sm:$0xff] %v2028
  %2457 = vst [vmem:[%s7 + $0x130] sm:$0xff] %v2043
  %2458 = vst [vmem:[%s7 + $0x138] sm:$0xff] %v2058
  %2459 = vst [vmem:[%s7 + $0x140] sm:$0xff] %v2073
  %2460 = vst [vmem:[%s7 + $0x148] sm:$0xff] %v2088
  %2461 = vst [vmem:[%s7 + $0x150] sm:$0xff] %v2103
  %2462 = vst [vmem:[%s7 + $0x158] sm:$0xff] %v2118
  %2463 = vst [vmem:[%s7 + $0x160] sm:$0xff] %v2133
  %2464 = vst [vmem:[%s7 + $0x168] sm:$0xff] %v2148
  %2465 = vst [vmem:[%s7 + $0x170] sm:$0xff] %v2163
  %2466 = vst [vmem:[%s7 + $0x178] sm:$0xff] %v2178
  %2467 = vst [vmem:[%s7 + $0x180] sm:$0xff] %v2193
  %2468 = vst [vmem:[%s7 + $0x188] sm:$0xff] %v2208
  %2469 = vst [vmem:[%s7 + $0x190] sm:$0xff] %v2223
  %2470 = vst [vmem:[%s7 + $0x198] sm:$0xff] %v2238
  %2471 = vst [vmem:[%s7 + $0x1a0] sm:$0xff] %v2253
  %2472 = vst [vmem:[%s7 + $0x1a8] sm:$0xff] %v2268
  %2473 = vst [vmem:[%s7 + $0x1b0] sm:$0xff] %v2283
  %2474 = vst [vmem:[%s7 + $0x1b8] sm:$0xff] %v2298
  %2475 = vst [vmem:[%s7 + $0x1c0] sm:$0xff] %v2313
  %2476 = vst [vmem:[%s7 + $0x1c8] sm:$0xff] %v2328
  %2477 = vst [vmem:[%s7 + $0x1d0] sm:$0xff] %v2343
  %2478 = vst [vmem:[%s7 + $0x1d8] sm:$0xff] %v2358
  %2479 = vst [vmem:[%s7 + $0x1e0] sm:$0xff] %v2373
  %2480 = vst [vmem:[%s7 + $0x1e8] sm:$0xff] %v2388
  %2481 = vst [vmem:[%s7 + $0x1f0] sm:$0xff] %v2403
  %2482 = vst [vmem:[%s7 + $0x1f8] sm:$0xff] %v2418
  // Predicated region
  $region30: #{nnmodel_forward.1} parent=0 // pred_check
    _
  $region31: #{nnmodel_forward.1} parent=0 // pred_check_branch
    %2484 = sbr.rel (0) target = $region33
  $region32: #{nnmodel_forward.1} parent=0 // pred_region
    _
  $region33: #{nnmodel_forward.1} parent=0 // pred_fallthru
    _
  // Predicated region
  $region34: #{nnmodel_forward.1} parent=0 // pred_check
    _
  $region35: #{nnmodel_forward.1} parent=0 // pred_check_branch
    %2486 = sbr.rel (0) target = $region37
  $region36: #{nnmodel_forward.1} parent=0 // pred_region
    _
  $region37: #{nnmodel_forward.1} parent=0 // pred_fallthru
    _

</llo_original>
